<compile_context>
chip_gen: v5e
topology: v5e:2x2
jax: 0.10.0
libtpu: 0.0.40
codegen_flags: <defaults>
</compile_context>

<pallas_src>
import functools

import jax
import jax.numpy as jnp
from jax import lax
from jax.experimental import pallas as pl
from jax.experimental.pallas import tpu as pltpu


# Contract both operands on their LAST dim: h[B,in] x w[out,in] -> [B,out].
_CT_LAST = (((1,), (1,)), ((), ()))


def _kernel(scal_ref,
            x_ref,
            q1wm, q1wl, p1wm, e1w, q1bm, q1bl, p1bm, e1b,
            q2wm, q2wl, p2wm, e2w, q2bm, q2bl, p2bm, e2b,
            q3wm, q3wl, p3wm, e3w,
            out_ref,
            *, n_total, batch):
    # SMEM scalars: [p_log_sigma, q3_b_mu, q3_b_log_sigma, p3_b_mu, eps3_b].
    pls = scal_ref[0]
    q3b = scal_ref[1]
    q3bls = scal_ref[2]
    p3b = scal_ref[3]
    e3b = scal_ref[4]
    inv = 0.5 * jnp.exp(-2.0 * pls)  # one scalar exp replaces per-element divides

    # Lane-partial accumulators keyed by lane width (in_features vs hidden).
    partials_a = {}
    partials_b = {}

    def reparam(qm_ref, ql_ref, pm_ref, e_ref):
        q_mu = qm_ref[...]
        q_ls = ql_ref[...]
        p_mu = pm_ref[...]
        eps = e_ref[...]
        sigma = jnp.exp(q_ls)                      # reused by the KL below
        w = q_mu + sigma * eps
        # Leading-axis (sublane) reduction only: plain VALU adds -> lane partials.
        a = jnp.sum(sigma * sigma + (q_mu - p_mu) ** 2, axis=0, keepdims=True)
        b = jnp.sum(q_ls, axis=0, keepdims=True)
        width = a.shape[-1]
        partials_a[width] = partials_a.get(width, 0.0) + a
        partials_b[width] = partials_b.get(width, 0.0) + b
        return w

    h = x_ref[...]

    # Layer 1: weights in native [out, in]; contract on last dims (no transpose).
    w1 = reparam(q1wm, q1wl, p1wm, e1w)
    b1 = reparam(q1bm, q1bl, p1bm, e1b)
    h = jnp.maximum(
        lax.dot_general(h, w1, _CT_LAST, preferred_element_type=jnp.float32) + b1,
        0.0)

    # Layer 2.
    w2 = reparam(q2wm, q2wl, p2wm, e2w)
    b2 = reparam(q2bm, q2bl, p2bm, e2b)
    h = jnp.maximum(
        lax.dot_general(h, w2, _CT_LAST, preferred_element_type=jnp.float32) + b2,
        0.0)

    # Layer 3: out_features == 1 -> VPU multiply + one lane reduction instead of
    # a degenerate N=1 MXU matmul.  Bias handled as scalars from SMEM.
    w3 = reparam(q3wm, q3wl, p3wm, e3w)            # [1, hidden]
    sig3b = jnp.exp(q3bls)
    bias3 = q3b + sig3b * e3b
    y = jnp.sum(h * w3, axis=-1, keepdims=True) + bias3   # [B, 1]

    # KL: one final cross-lane reduction per accumulator, scalar tail folded in.
    sum_a = sig3b * sig3b + (q3b - p3b) ** 2       # layer-3 bias contribution
    sum_b = q3bls
    for v in partials_a.values():
        sum_a = sum_a + jnp.sum(v)
    for v in partials_b.values():
        sum_b = sum_b + jnp.sum(v)
    kl = inv * sum_a - sum_b + jnp.float32(n_total) * (pls - 0.5)

    # Single lane-dense output tile: lanes [0,128) = y broadcast across lanes,
    # lanes [128,256) = KL scalar broadcast.  One unmasked-lane store, one DMA.
    out_ref[...] = jnp.concatenate(
        [jnp.broadcast_to(y, (batch, 128)),
         jnp.full((batch, 128), kl, dtype=jnp.float32)],
        axis=1)


def bayesian_nondiag_forward(x, layers, eps, p_log_sigma, in_features):
    """layers: list of 3 tuples (q_w_mu, q_w_ls, q_b_mu, q_b_ls, p_w_mu, p_b_mu),
    weights in PyTorch [out, in] convention, biases [1, out].
    eps: list of 3 tuples (eps_w, eps_b).  Returns (y, kl, p_log_sigma)."""
    x2 = x.reshape(-1, in_features).astype(jnp.float32)
    B = x2.shape[0]

    (q1wm, q1wl, q1bm, q1bl, p1wm, p1bm), (e1w, e1b) = layers[0], eps[0]
    (q2wm, q2wl, q2bm, q2bl, p2wm, p2bm), (e2w, e2b) = layers[1], eps[1]
    (q3wm, q3wl, q3bm, q3bl, p3wm, p3bm), (e3w, e3b) = layers[2], eps[2]

    # Five SMEM scalars: p_log_sigma and the (1,1) layer-3 bias parameters.
    scal = jnp.stack([
        jnp.asarray(p_log_sigma, jnp.float32).reshape(()),
        q3bm.reshape(()).astype(jnp.float32),
        q3bl.reshape(()).astype(jnp.float32),
        p3bm.reshape(()).astype(jnp.float32),
        e3b.reshape(()).astype(jnp.float32),
    ])

    # Total posterior-element count for the folded (pls - 0.5) KL constant.
    # (Exact in f32 for counts < 2^24.)
    n_total = int(q1wm.size + q1bm.size + q2wm.size + q2bm.size
                  + q3wm.size + q3bm.size)

    vmem = pl.BlockSpec(memory_space=pltpu.MemorySpace.VMEM)
    smem = pl.BlockSpec(memory_space=pltpu.MemorySpace.SMEM)

    kernel = functools.partial(_kernel, n_total=n_total, batch=B)

    out = pl.pallas_call(
        kernel,
        out_shape=jax.ShapeDtypeStruct((B, 256), jnp.float32),
        in_specs=[smem] + [vmem] * 21,
        out_specs=vmem,
    )(scal, x2,
      q1wm, q1wl, p1wm, e1w, q1bm, q1bl, p1bm, e1b,
      q2wm, q2wl, p2wm, e2w, q2bm, q2bl, p2bm, e2b,
      q3wm, q3wl, p3wm, e3w)

    y = out[:, :1]
    kl = out[0, 128]
    return y, kl, p_log_sigma


def _kl_sum(pls, q_mu, q_ls, p_mu):
    # Reference-form KL: sum over elements of
    # KL( N(q_mu, exp(q_ls)^2) || N(p_mu, exp(pls)^2) )
    return jnp.sum(
        pls - q_ls
        + (jnp.exp(2.0 * q_ls) + (q_mu - p_mu) ** 2) / (2.0 * jnp.exp(2.0 * pls))
        - 0.5
    )


def _reference(x, layers, eps, p_log_sigma, in_features):
    h = x.reshape(-1, in_features).astype(jnp.float32)
    kl_total = jnp.float32(0.0)
    pls = jnp.float32(p_log_sigma)
    for i, ((qwm, qwl, qbm, qbl, pwm, pbm), (ew, eb)) in enumerate(zip(layers, eps)):
        w = qwm + jnp.exp(qwl) * ew
        b = qbm + jnp.exp(qbl) * eb
        h = jnp.dot(h, w.T, preferred_element_type=jnp.float32) + b
        if i < 2:
            h = jnp.maximum(h, 0.0)
        kl_total = kl_total + _kl_sum(pls, qwm, qwl, pwm) + _kl_sum(pls, qbm, qbl, pbm)
    return h, kl_total


if __name__ == "__main__":
    # Small shapes consistent with the module: x.view(-1, in_features) of an
    # NCHW image batch, 3-layer MLP hidden_features -> hidden_features -> 1.
    B, C, H, W = 4, 4, 8, 8
    in_features = C * H * W            # 256
    hidden_features = 128
    out_features = 1
    p_log_sigma_init = -6.0
    # Mimic: p_log_cov = Normal(mean=exp(p_log_sigma), std=0.5); use the mean
    # deterministically.
    p_log_cov = float(jnp.exp(jnp.float32(p_log_sigma_init)))

    key = jax.random.PRNGKey(0)
    keys = iter(jax.random.split(key, 32))

    def make_layer(fan_in, fan_out):
        q_w_mu = 0.1 * jax.random.normal(next(keys), (fan_out, fan_in), jnp.float32)
        q_w_ls = jnp.full((fan_out, fan_in), -5.0, jnp.float32) \
            + 0.01 * jax.random.normal(next(keys), (fan_out, fan_in), jnp.float32)
        q_b_mu = 0.1 * jax.random.normal(next(keys), (1, fan_out), jnp.float32)
        q_b_ls = jnp.full((1, fan_out), -5.0, jnp.float32) \
            + 0.01 * jax.random.normal(next(keys), (1, fan_out), jnp.float32)
        p_w_mu = 0.1 * jax.random.normal(next(keys), (fan_out, fan_in), jnp.float32)
        p_b_mu = 0.1 * jax.random.normal(next(keys), (1, fan_out), jnp.float32)
        e_w = jax.random.normal(next(keys), (fan_out, fan_in), jnp.float32)
        e_b = jax.random.normal(next(keys), (1, fan_out), jnp.float32)
        return (q_w_mu, q_w_ls, q_b_mu, q_b_ls, p_w_mu, p_b_mu), (e_w, e_b)

    l1, e1 = make_layer(in_features, hidden_features)
    l2, e2 = make_layer(hidden_features, hidden_features)
    l3, e3 = make_layer(hidden_features, out_features)
    layers = [l1, l2, l3]
    eps = [e1, e2, e3]

    x = jax.random.normal(next(keys), (B, C, H, W), jnp.float32)

    y, kl, pls_out = bayesian_nondiag_forward(x, layers, eps, p_log_cov, in_features)
    jax.block_until_ready((y, kl))

    y_ref, kl_ref = _reference(x, layers, eps, p_log_cov, in_features)
    assert y.shape == (B, 1)
    assert jnp.allclose(y, y_ref, rtol=1e-2, atol=1e-2), (y, y_ref)
    assert jnp.allclose(kl, kl_ref, rtol=1e-2, atol=1e-2), (kl, kl_ref)

    print("KERNEL_OK")
</pallas_src>

<mosaic_0001>
module attributes {stable_mosaic.version = 11 : i64} {
  func.func @_kernel(%arg0: memref<5xf32, #tpu.memory_space<smem>>, %arg1: memref<4x256xf32, #tpu.memory_space<vmem>>, %arg2: memref<128x256xf32, #tpu.memory_space<vmem>>, %arg3: memref<128x256xf32, #tpu.memory_space<vmem>>, %arg4: memref<128x256xf32, #tpu.memory_space<vmem>>, %arg5: memref<128x256xf32, #tpu.memory_space<vmem>>, %arg6: memref<1x128xf32, #tpu.memory_space<vmem>>, %arg7: memref<1x128xf32, #tpu.memory_space<vmem>>, %arg8: memref<1x128xf32, #tpu.memory_space<vmem>>, %arg9: memref<1x128xf32, #tpu.memory_space<vmem>>, %arg10: memref<128x128xf32, #tpu.memory_space<vmem>>, %arg11: memref<128x128xf32, #tpu.memory_space<vmem>>, %arg12: memref<128x128xf32, #tpu.memory_space<vmem>>, %arg13: memref<128x128xf32, #tpu.memory_space<vmem>>, %arg14: memref<1x128xf32, #tpu.memory_space<vmem>>, %arg15: memref<1x128xf32, #tpu.memory_space<vmem>>, %arg16: memref<1x128xf32, #tpu.memory_space<vmem>>, %arg17: memref<1x128xf32, #tpu.memory_space<vmem>>, %arg18: memref<1x128xf32, #tpu.memory_space<vmem>>, %arg19: memref<1x128xf32, #tpu.memory_space<vmem>>, %arg20: memref<1x128xf32, #tpu.memory_space<vmem>>, %arg21: memref<1x128xf32, #tpu.memory_space<vmem>>, %arg22: memref<4x256xf32, #tpu.memory_space<vmem>>) attributes {dimension_semantics = [], scalar_prefetch = 0 : i64, scratch_operands = 0 : i64, tpu.core_type = #tpu.core_type<tc>} {
    %c0 = arith.constant 0 : index
    %0 = memref.load %arg0[%c0] : memref<5xf32, #tpu.memory_space<smem>>
    %c1 = arith.constant 1 : index
    %1 = memref.load %arg0[%c1] : memref<5xf32, #tpu.memory_space<smem>>
    %c2 = arith.constant 2 : index
    %2 = memref.load %arg0[%c2] : memref<5xf32, #tpu.memory_space<smem>>
    %c3 = arith.constant 3 : index
    %3 = memref.load %arg0[%c3] : memref<5xf32, #tpu.memory_space<smem>>
    %c4 = arith.constant 4 : index
    %4 = memref.load %arg0[%c4] : memref<5xf32, #tpu.memory_space<smem>>
    %cst = arith.constant -2.000000e+00 : f32
    %5 = arith.mulf %cst, %0 : f32
    %6 = math.exp %5 : f32
    %cst_0 = arith.constant 5.000000e-01 : f32
    %7 = arith.mulf %cst_0, %6 : f32
    %c0_1 = arith.constant 0 : index
    %c0_2 = arith.constant 0 : index
    %8 = vector.load %arg1[%c0_1, %c0_2] : memref<4x256xf32, #tpu.memory_space<vmem>>, vector<4x256xf32>
    %c0_3 = arith.constant 0 : index
    %c0_4 = arith.constant 0 : index
    %9 = vector.load %arg2[%c0_3, %c0_4] : memref<128x256xf32, #tpu.memory_space<vmem>>, vector<128x256xf32>
    %c0_5 = arith.constant 0 : index
    %c0_6 = arith.constant 0 : index
    %10 = vector.load %arg3[%c0_5, %c0_6] : memref<128x256xf32, #tpu.memory_space<vmem>>, vector<128x256xf32>
    %c0_7 = arith.constant 0 : index
    %c0_8 = arith.constant 0 : index
    %11 = vector.load %arg4[%c0_7, %c0_8] : memref<128x256xf32, #tpu.memory_space<vmem>>, vector<128x256xf32>
    %c0_9 = arith.constant 0 : index
    %c0_10 = arith.constant 0 : index
    %12 = vector.load %arg5[%c0_9, %c0_10] : memref<128x256xf32, #tpu.memory_space<vmem>>, vector<128x256xf32>
    %13 = math.exp %10 : vector<128x256xf32>
    %14 = arith.mulf %13, %12 : vector<128x256xf32>
    %15 = arith.addf %9, %14 : vector<128x256xf32>
    %16 = arith.mulf %13, %13 : vector<128x256xf32>
    %17 = arith.subf %9, %11 : vector<128x256xf32>
    %18 = arith.mulf %17, %17 : vector<128x256xf32>
    %19 = arith.addf %16, %18 : vector<128x256xf32>
    %cst_11 = arith.constant dense<0.000000e+00> : vector<256xf32>
    %20 = vector.multi_reduction <add>, %19, %cst_11 [0] : vector<128x256xf32> to vector<256xf32>
    %21 = vector.shape_cast %20 : vector<256xf32> to vector<1x256xf32>
    %cst_12 = arith.constant dense<0.000000e+00> : vector<256xf32>
    %22 = vector.multi_reduction <add>, %10, %cst_12 [0] : vector<128x256xf32> to vector<256xf32>
    %23 = vector.shape_cast %22 : vector<256xf32> to vector<1x256xf32>
    %cst_13 = arith.constant 0.000000e+00 : f32
    %24 = vector.broadcast %cst_13 : f32 to vector<1x256xf32>
    %25 = arith.addf %24, %21 : vector<1x256xf32>
    %cst_14 = arith.constant 0.000000e+00 : f32
    %26 = vector.broadcast %cst_14 : f32 to vector<1x256xf32>
    %27 = arith.addf %26, %23 : vector<1x256xf32>
    %c0_15 = arith.constant 0 : index
    %c0_16 = arith.constant 0 : index
    %28 = vector.load %arg6[%c0_15, %c0_16] : memref<1x128xf32, #tpu.memory_space<vmem>>, vector<1x128xf32>
    %c0_17 = arith.constant 0 : index
    %c0_18 = arith.constant 0 : index
    %29 = vector.load %arg7[%c0_17, %c0_18] : memref<1x128xf32, #tpu.memory_space<vmem>>, vector<1x128xf32>
    %c0_19 = arith.constant 0 : index
    %c0_20 = arith.constant 0 : index
    %30 = vector.load %arg8[%c0_19, %c0_20] : memref<1x128xf32, #tpu.memory_space<vmem>>, vector<1x128xf32>
    %c0_21 = arith.constant 0 : index
    %c0_22 = arith.constant 0 : index
    %31 = vector.load %arg9[%c0_21, %c0_22] : memref<1x128xf32, #tpu.memory_space<vmem>>, vector<1x128xf32>
    %32 = math.exp %29 : vector<1x128xf32>
    %33 = arith.mulf %32, %31 : vector<1x128xf32>
    %34 = arith.addf %28, %33 : vector<1x128xf32>
    %35 = arith.mulf %32, %32 : vector<1x128xf32>
    %36 = arith.subf %28, %30 : vector<1x128xf32>
    %37 = arith.mulf %36, %36 : vector<1x128xf32>
    %38 = arith.addf %35, %37 : vector<1x128xf32>
    %cst_23 = arith.constant dense<0.000000e+00> : vector<128xf32>
    %39 = vector.multi_reduction <add>, %38, %cst_23 [0] : vector<1x128xf32> to vector<128xf32>
    %40 = vector.shape_cast %39 : vector<128xf32> to vector<1x128xf32>
    %cst_24 = arith.constant dense<0.000000e+00> : vector<128xf32>
    %41 = vector.multi_reduction <add>, %29, %cst_24 [0] : vector<1x128xf32> to vector<128xf32>
    %42 = vector.shape_cast %41 : vector<128xf32> to vector<1x128xf32>
    %cst_25 = arith.constant 0.000000e+00 : f32
    %43 = vector.broadcast %cst_25 : f32 to vector<1x128xf32>
    %44 = arith.addf %43, %40 : vector<1x128xf32>
    %cst_26 = arith.constant 0.000000e+00 : f32
    %45 = vector.broadcast %cst_26 : f32 to vector<1x128xf32>
    %46 = arith.addf %45, %42 : vector<1x128xf32>
    %cst_27 = arith.constant dense<0.000000e+00> : vector<4x128xf32>
    %47 = tpu.matmul %8, %15, %cst_27 {dimension_numbers = #tpu.dot_dimension_numbers<[1], [1], [0], [0], [0, 0, 1, 0], [], []>} : vector<4x256xf32>, vector<128x256xf32>, vector<4x128xf32> -> vector<4x128xf32>
    %48 = vector.broadcast %34 : vector<1x128xf32> to vector<4x128xf32>
    %49 = arith.addf %47, %48 : vector<4x128xf32>
    %cst_28 = arith.constant 0.000000e+00 : f32
    %50 = vector.broadcast %cst_28 : f32 to vector<4x128xf32>
    %51 = arith.maximumf %49, %50 : vector<4x128xf32>
    %c0_29 = arith.constant 0 : index
    %c0_30 = arith.constant 0 : index
    %52 = vector.load %arg10[%c0_29, %c0_30] : memref<128x128xf32, #tpu.memory_space<vmem>>, vector<128x128xf32>
    %c0_31 = arith.constant 0 : index
    %c0_32 = arith.constant 0 : index
    %53 = vector.load %arg11[%c0_31, %c0_32] : memref<128x128xf32, #tpu.memory_space<vmem>>, vector<128x128xf32>
    %c0_33 = arith.constant 0 : index
    %c0_34 = arith.constant 0 : index
    %54 = vector.load %arg12[%c0_33, %c0_34] : memref<128x128xf32, #tpu.memory_space<vmem>>, vector<128x128xf32>
    %c0_35 = arith.constant 0 : index
    %c0_36 = arith.constant 0 : index
    %55 = vector.load %arg13[%c0_35, %c0_36] : memref<128x128xf32, #tpu.memory_space<vmem>>, vector<128x128xf32>
    %56 = math.exp %53 : vector<128x128xf32>
    %57 = arith.mulf %56, %55 : vector<128x128xf32>
    %58 = arith.addf %52, %57 : vector<128x128xf32>
    %59 = arith.mulf %56, %56 : vector<128x128xf32>
    %60 = arith.subf %52, %54 : vector<128x128xf32>
    %61 = arith.mulf %60, %60 : vector<128x128xf32>
    %62 = arith.addf %59, %61 : vector<128x128xf32>
    %cst_37 = arith.constant dense<0.000000e+00> : vector<128xf32>
    %63 = vector.multi_reduction <add>, %62, %cst_37 [0] : vector<128x128xf32> to vector<128xf32>
    %64 = vector.shape_cast %63 : vector<128xf32> to vector<1x128xf32>
    %cst_38 = arith.constant dense<0.000000e+00> : vector<128xf32>
    %65 = vector.multi_reduction <add>, %53, %cst_38 [0] : vector<128x128xf32> to vector<128xf32>
    %66 = vector.shape_cast %65 : vector<128xf32> to vector<1x128xf32>
    %67 = arith.addf %44, %64 : vector<1x128xf32>
    %68 = arith.addf %46, %66 : vector<1x128xf32>
    %c0_39 = arith.constant 0 : index
    %c0_40 = arith.constant 0 : index
    %69 = vector.load %arg14[%c0_39, %c0_40] : memref<1x128xf32, #tpu.memory_space<vmem>>, vector<1x128xf32>
    %c0_41 = arith.constant 0 : index
    %c0_42 = arith.constant 0 : index
    %70 = vector.load %arg15[%c0_41, %c0_42] : memref<1x128xf32, #tpu.memory_space<vmem>>, vector<1x128xf32>
    %c0_43 = arith.constant 0 : index
    %c0_44 = arith.constant 0 : index
    %71 = vector.load %arg16[%c0_43, %c0_44] : memref<1x128xf32, #tpu.memory_space<vmem>>, vector<1x128xf32>
    %c0_45 = arith.constant 0 : index
    %c0_46 = arith.constant 0 : index
    %72 = vector.load %arg17[%c0_45, %c0_46] : memref<1x128xf32, #tpu.memory_space<vmem>>, vector<1x128xf32>
    %73 = math.exp %70 : vector<1x128xf32>
    %74 = arith.mulf %73, %72 : vector<1x128xf32>
    %75 = arith.addf %69, %74 : vector<1x128xf32>
    %76 = arith.mulf %73, %73 : vector<1x128xf32>
    %77 = arith.subf %69, %71 : vector<1x128xf32>
    %78 = arith.mulf %77, %77 : vector<1x128xf32>
    %79 = arith.addf %76, %78 : vector<1x128xf32>
    %cst_47 = arith.constant dense<0.000000e+00> : vector<128xf32>
    %80 = vector.multi_reduction <add>, %79, %cst_47 [0] : vector<1x128xf32> to vector<128xf32>
    %81 = vector.shape_cast %80 : vector<128xf32> to vector<1x128xf32>
    %cst_48 = arith.constant dense<0.000000e+00> : vector<128xf32>
    %82 = vector.multi_reduction <add>, %70, %cst_48 [0] : vector<1x128xf32> to vector<128xf32>
    %83 = vector.shape_cast %82 : vector<128xf32> to vector<1x128xf32>
    %84 = arith.addf %67, %81 : vector<1x128xf32>
    %85 = arith.addf %68, %83 : vector<1x128xf32>
    %cst_49 = arith.constant dense<0.000000e+00> : vector<4x128xf32>
    %86 = tpu.matmul %51, %58, %cst_49 {dimension_numbers = #tpu.dot_dimension_numbers<[1], [1], [0], [0], [0, 0, 1, 0], [], []>} : vector<4x128xf32>, vector<128x128xf32>, vector<4x128xf32> -> vector<4x128xf32>
    %87 = vector.broadcast %75 : vector<1x128xf32> to vector<4x128xf32>
    %88 = arith.addf %86, %87 : vector<4x128xf32>
    %cst_50 = arith.constant 0.000000e+00 : f32
    %89 = vector.broadcast %cst_50 : f32 to vector<4x128xf32>
    %90 = arith.maximumf %88, %89 : vector<4x128xf32>
    %c0_51 = arith.constant 0 : index
    %c0_52 = arith.constant 0 : index
    %91 = vector.load %arg18[%c0_51, %c0_52] : memref<1x128xf32, #tpu.memory_space<vmem>>, vector<1x128xf32>
    %c0_53 = arith.constant 0 : index
    %c0_54 = arith.constant 0 : index
    %92 = vector.load %arg19[%c0_53, %c0_54] : memref<1x128xf32, #tpu.memory_space<vmem>>, vector<1x128xf32>
    %c0_55 = arith.constant 0 : index
    %c0_56 = arith.constant 0 : index
    %93 = vector.load %arg20[%c0_55, %c0_56] : memref<1x128xf32, #tpu.memory_space<vmem>>, vector<1x128xf32>
    %c0_57 = arith.constant 0 : index
    %c0_58 = arith.constant 0 : index
    %94 = vector.load %arg21[%c0_57, %c0_58] : memref<1x128xf32, #tpu.memory_space<vmem>>, vector<1x128xf32>
    %95 = math.exp %92 : vector<1x128xf32>
    %96 = arith.mulf %95, %94 : vector<1x128xf32>
    %97 = arith.addf %91, %96 : vector<1x128xf32>
    %98 = arith.mulf %95, %95 : vector<1x128xf32>
    %99 = arith.subf %91, %93 : vector<1x128xf32>
    %100 = arith.mulf %99, %99 : vector<1x128xf32>
    %101 = arith.addf %98, %100 : vector<1x128xf32>
    %cst_59 = arith.constant dense<0.000000e+00> : vector<128xf32>
    %102 = vector.multi_reduction <add>, %101, %cst_59 [0] : vector<1x128xf32> to vector<128xf32>
    %103 = vector.shape_cast %102 : vector<128xf32> to vector<1x128xf32>
    %cst_60 = arith.constant dense<0.000000e+00> : vector<128xf32>
    %104 = vector.multi_reduction <add>, %92, %cst_60 [0] : vector<1x128xf32> to vector<128xf32>
    %105 = vector.shape_cast %104 : vector<128xf32> to vector<1x128xf32>
    %106 = arith.addf %84, %103 : vector<1x128xf32>
    %107 = arith.addf %85, %105 : vector<1x128xf32>
    %108 = math.exp %2 : f32
    %109 = arith.mulf %108, %4 : f32
    %110 = arith.addf %1, %109 : f32
    %111 = vector.broadcast %97 : vector<1x128xf32> to vector<4x128xf32>
    %112 = arith.mulf %90, %111 : vector<4x128xf32>
    %cst_61 = arith.constant dense<0.000000e+00> : vector<4xf32>
    %113 = vector.multi_reduction <add>, %112, %cst_61 [1] : vector<4x128xf32> to vector<4xf32>
    %114 = vector.shape_cast %113 : vector<4xf32> to vector<4x1xf32>
    %115 = vector.broadcast %110 : f32 to vector<4x1xf32>
    %116 = arith.addf %114, %115 : vector<4x1xf32>
    %117 = arith.mulf %108, %108 : f32
    %118 = arith.subf %1, %3 : f32
    %119 = arith.mulf %118, %118 : f32
    %120 = arith.addf %117, %119 : f32
    %121 = vector.shape_cast %25 : vector<1x256xf32> to vector<1x1x256xf32>
    %cst_62 = arith.constant dense<0.000000e+00> : vector<1xf32>
    %122 = vector.multi_reduction <add>, %121, %cst_62 [1, 2] : vector<1x1x256xf32> to vector<1xf32>
    %123 = vector.shape_cast %122 : vector<1xf32> to vector<1x1x1xf32>
    %124 = vector.extract %123[0, 0, 0] : f32 from vector<1x1x1xf32>
    %125 = arith.addf %120, %124 : f32
    %126 = vector.shape_cast %106 : vector<1x128xf32> to vector<1x1x128xf32>
    %cst_63 = arith.constant dense<0.000000e+00> : vector<1xf32>
    %127 = vector.multi_reduction <add>, %126, %cst_63 [1, 2] : vector<1x1x128xf32> to vector<1xf32>
    %128 = vector.shape_cast %127 : vector<1xf32> to vector<1x1x1xf32>
    %129 = vector.extract %128[0, 0, 0] : f32 from vector<1x1x1xf32>
    %130 = arith.addf %125, %129 : f32
    %131 = vector.shape_cast %27 : vector<1x256xf32> to vector<1x1x256xf32>
    %cst_64 = arith.constant dense<0.000000e+00> : vector<1xf32>
    %132 = vector.multi_reduction <add>, %131, %cst_64 [1, 2] : vector<1x1x256xf32> to vector<1xf32>
    %133 = vector.shape_cast %132 : vector<1xf32> to vector<1x1x1xf32>
    %134 = vector.extract %133[0, 0, 0] : f32 from vector<1x1x1xf32>
    %135 = arith.addf %2, %134 : f32
    %136 = vector.shape_cast %107 : vector<1x128xf32> to vector<1x1x128xf32>
    %cst_65 = arith.constant dense<0.000000e+00> : vector<1xf32>
    %137 = vector.multi_reduction <add>, %136, %cst_65 [1, 2] : vector<1x1x128xf32> to vector<1xf32>
    %138 = vector.shape_cast %137 : vector<1xf32> to vector<1x1x1xf32>
    %139 = vector.extract %138[0, 0, 0] : f32 from vector<1x1x1xf32>
    %140 = arith.addf %135, %139 : f32
    %141 = arith.mulf %7, %130 : f32
    %142 = arith.subf %141, %140 : f32
    %cst_66 = arith.constant 5.000000e-01 : f32
    %143 = arith.subf %0, %cst_66 : f32
    %cst_67 = arith.constant 4.953700e+04 : f32
    %144 = arith.mulf %cst_67, %143 : f32
    %145 = arith.addf %142, %144 : f32
    %146 = vector.shape_cast %116 : vector<4x1xf32> to vector<4x1xf32>
    %147 = vector.broadcast %146 : vector<4x1xf32> to vector<4x128xf32>
    %148 = vector.broadcast %145 : f32 to vector<4x128xf32>
    %149 = tpu.concatenate %147, %148 in 1 : vector<4x128xf32>, vector<4x128xf32> -> vector<4x256xf32>
    %c0_68 = arith.constant 0 : index
    %c0_69 = arith.constant 0 : index
    %150 = vector.load %arg22[%c0_68, %c0_69] : memref<4x256xf32, #tpu.memory_space<vmem>>, vector<4x256xf32>
    tpu.vector_store %arg22[%c0_68, %c0_69], %149 {strides = array<i32>} : memref<4x256xf32, #tpu.memory_space<vmem>>, vector<4x256xf32>,
    return
  }
}

</mosaic_0001>

<llo_original>
// kernel: tpu_custom_call.1
$region0: #{tpu_custom_call.1}
  #allocation0 [shape = 'u32[]', space=smem, size = 0x4, offset = 0x4, fixed_abs, tag = 'smem constant byte address 0x4 - core index']
  #allocation1 [shape = 'u32[72,128]{1,0:T(1,128)}', space=vmem, size = 0x9000, scoped, tag = 'internal scratch']
  %s0 = inlined_call_operand.hbm [shape: f32[5], index: 0, kind: input, shape index: {}]
  %s1 = inlined_call_operand.hbm [shape: f32[4,256], index: 1, kind: input, shape index: {}]
  %s2 = inlined_call_operand.hbm [shape: f32[128,256], index: 2, kind: input, shape index: {}]
  %s3 = inlined_call_operand.hbm [shape: f32[128,256], index: 3, kind: input, shape index: {}]
  %s4 = inlined_call_operand.hbm [shape: f32[128,256], index: 4, kind: input, shape index: {}]
  %s5 = inlined_call_operand.hbm [shape: f32[128,256], index: 5, kind: input, shape index: {}]
  %s6 = inlined_call_operand.vmem [shape: f32[1,128], index: 6, kind: input, shape index: {}]
  %s7 = inlined_call_operand.vmem [shape: f32[1,128], index: 7, kind: input, shape index: {}]
  %s8 = inlined_call_operand.vmem [shape: f32[1,128], index: 8, kind: input, shape index: {}]
  %s9 = inlined_call_operand.vmem [shape: f32[1,128], index: 9, kind: input, shape index: {}]
  %s10 = inlined_call_operand.hbm [shape: f32[128,128], index: 10, kind: input, shape index: {}]
  %s11 = inlined_call_operand.hbm [shape: f32[128,128], index: 11, kind: input, shape index: {}]
  %s12 = inlined_call_operand.hbm [shape: f32[128,128], index: 12, kind: input, shape index: {}]
  %s13 = inlined_call_operand.hbm [shape: f32[128,128], index: 13, kind: input, shape index: {}]
  %s14 = inlined_call_operand.vmem [shape: f32[1,128], index: 14, kind: input, shape index: {}]
  %s15 = inlined_call_operand.vmem [shape: f32[1,128], index: 15, kind: input, shape index: {}]
  %s16 = inlined_call_operand.vmem [shape: f32[1,128], index: 16, kind: input, shape index: {}]
  %s17 = inlined_call_operand.vmem [shape: f32[1,128], index: 17, kind: input, shape index: {}]
  %s18 = inlined_call_operand.vmem [shape: f32[1,128], index: 18, kind: input, shape index: {}]
  %s19 = inlined_call_operand.vmem [shape: f32[1,128], index: 19, kind: input, shape index: {}]
  %s20 = inlined_call_operand.vmem [shape: f32[1,128], index: 20, kind: input, shape index: {}]
  %s21 = inlined_call_operand.vmem [shape: f32[1,128], index: 21, kind: input, shape index: {}]
  %s22 = inlined_call_operand.hbm [shape: f32[4,256], index: 22, kind: output, shape index: {}]
  %s23 = sld [smem:[#allocation0]]
  $region138: #{tpu_custom_call.1} parent=0
    _
  %s25 = ssub.s32 1, %s23
  %s26 = scalar_select 0, %s25, %s23
  $region1: #{tpu_custom_call.1} parent=0
    #allocation2 [shape = 'u8[512]{0}', space=smem, size = 0x200, scoped, tag = 'input window, operand 0, single buffered']
    #allocation3 [shape = 's32[1]{0}', space=sflag, size = 0x4, scoped, tag = 'scoped memory for tpu_custom_call.1']
    #allocation4 [shape = 's32[1]{0}', space=sflag, size = 0x4, scoped, tag = 'scoped memory for tpu_custom_call.1']
    #allocation5 [shape = 's32[1]{0}', space=sflag, size = 0x4, scoped, tag = 'scoped memory for tpu_custom_call.1']
    #allocation6 [shape = 'u8[4096]{0}', space=vmem, size = 0x1000, scoped, tag = 'input window, operand 1, single buffered']
    #allocation7 [shape = 'u8[131072]{0}', space=vmem, size = 0x20000, scoped, tag = 'input window, operand 2, single buffered']
    #allocation8 [shape = 's32[1]{0}', space=sflag, size = 0x4, scoped, tag = 'scoped memory for tpu_custom_call.1']
    #allocation9 [shape = 'u8[131072]{0}', space=vmem, size = 0x20000, scoped, tag = 'input window, operand 3, single buffered']
    #allocation10 [shape = 'u8[131072]{0}', space=vmem, size = 0x20000, scoped, tag = 'input window, operand 4, single buffered']
    #allocation11 [shape = 's32[1]{0}', space=sflag, size = 0x4, scoped, tag = 'scoped memory for tpu_custom_call.1']
    #allocation12 [shape = 'u8[131072]{0}', space=vmem, size = 0x20000, scoped, tag = 'input window, operand 5, single buffered']
    #allocation13 [shape = 'u8[65536]{0}', space=vmem, size = 0x10000, scoped, tag = 'input window, operand 10, single buffered']
    #allocation14 [shape = 's32[1]{0}', space=sflag, size = 0x4, scoped, tag = 'scoped memory for tpu_custom_call.1']
    #allocation15 [shape = 'u8[65536]{0}', space=vmem, size = 0x10000, scoped, tag = 'input window, operand 11, single buffered']
    #allocation16 [shape = 'u8[65536]{0}', space=vmem, size = 0x10000, scoped, tag = 'input window, operand 12, single buffered']
    #allocation17 [shape = 's32[1]{0}', space=sflag, size = 0x4, scoped, tag = 'scoped memory for tpu_custom_call.1']
    #allocation18 [shape = 'u8[65536]{0}', space=vmem, size = 0x10000, scoped, tag = 'input window, operand 13, single buffered']
    #allocation19 [shape = 'u8[4096]{0}', space=vmem, size = 0x1000, scoped, tag = 'output window, operand 0, single buffered']
    %27 = vsyncpa [#allocation5], 0
    %28 = vsyncpa [#allocation3], 0
    %29 = vsyncpa [#allocation8], 0
    %30 = vsyncpa [#allocation11], 0
    %31 = vsyncpa [#allocation14], 0
    %32 = vsyncpa [#allocation17], 0
    %33 = vsyncpa [#allocation4], 0
    // Predicated region
    $region2: #{tpu_custom_call.1} parent=1 // pred_check
      _
    $region3: #{tpu_custom_call.1} parent=1 // pred_check_branch
      %35 = sbr.rel (0) target = $region5
    $region4: #{tpu_custom_call.1} parent=1 // pred_region
      %37 = vsyncadd [#allocation5], 0
      %s39 = sshll.u32 %s0, 4
      %s40 = int_to_ptr.hbm [resolvable:$true] %s39
      %42 = dma.hbm_to_smem %s40, 16, [#allocation2], [#allocation5]
    $region5: #{tpu_custom_call.1} parent=1 // pred_fallthru
      _
    // Predicated region
    $region6: #{tpu_custom_call.1} parent=1 // pred_check
      _
    $region7: #{tpu_custom_call.1} parent=1 // pred_check_branch
      %44 = sbr.rel (0) target = $region9
    $region8: #{tpu_custom_call.1} parent=1 // pred_region
      %46 = vsyncadd [#allocation3], 0
      %s48 = sshll.u32 %s1, 4
      %s49 = int_to_ptr.hbm [resolvable:$true] %s48
      %s50 = sshll.u32 [#allocation6], 4
      %s51 = int_to_ptr.vmem [resolvable:$true] %s50
      %53 = dma.hbm_to_vmem [thread:$0]  %s49, 128, %s51, [#allocation3]
    $region9: #{tpu_custom_call.1} parent=1 // pred_fallthru
      _
    // Predicated region
    $region10: #{tpu_custom_call.1} parent=1 // pred_check
      _
    $region11: #{tpu_custom_call.1} parent=1 // pred_check_branch
      %55 = sbr.rel (0) target = $region13
    $region12: #{tpu_custom_call.1} parent=1 // pred_region
      %57 = vsyncadd [#allocation8], 0
      %s58 = sshll.u32 %s2, 4
      %s59 = int_to_ptr.hbm [resolvable:$true] %s58
      %s60 = sshll.u32 [#allocation7], 4
      %s61 = int_to_ptr.vmem [resolvable:$true] %s60
      %66 = dma.hbm_to_vmem [thread:$0]  %s59, 4096, %s61, [#allocation8], 256, 256, 16
    $region13: #{tpu_custom_call.1} parent=1 // pred_fallthru
      _
    // Predicated region
    $region14: #{tpu_custom_call.1} parent=1 // pred_check
      _
    $region15: #{tpu_custom_call.1} parent=1 // pred_check_branch
      %68 = sbr.rel (0) target = $region17
    $region16: #{tpu_custom_call.1} parent=1 // pred_region
      %70 = vsyncadd [#allocation8], 0
      %s71 = sshll.u32 %s3, 4
      %s72 = int_to_ptr.hbm [resolvable:$true] %s71
      %s73 = sshll.u32 [#allocation9], 4
      %s74 = int_to_ptr.vmem [resolvable:$true] %s73
      %79 = dma.hbm_to_vmem [thread:$0]  %s72, 4096, %s74, [#allocation8], 256, 256, 16
    $region17: #{tpu_custom_call.1} parent=1 // pred_fallthru
      _
    // Predicated region
    $region18: #{tpu_custom_call.1} parent=1 // pred_check
      _
    $region19: #{tpu_custom_call.1} parent=1 // pred_check_branch
      %81 = sbr.rel (0) target = $region21
    $region20: #{tpu_custom_call.1} parent=1 // pred_region
      %83 = vsyncadd [#allocation11], 0
      %s84 = sshll.u32 %s4, 4
      %s85 = int_to_ptr.hbm [resolvable:$true] %s84
      %s86 = sshll.u32 [#allocation10], 4
      %s87 = int_to_ptr.vmem [resolvable:$true] %s86
      %92 = dma.hbm_to_vmem [thread:$0]  %s85, 4096, %s87, [#allocation11], 256, 256, 16
    $region21: #{tpu_custom_call.1} parent=1 // pred_fallthru
      _
    // Predicated region
    $region22: #{tpu_custom_call.1} parent=1 // pred_check
      _
    $region23: #{tpu_custom_call.1} parent=1 // pred_check_branch
      %94 = sbr.rel (0) target = $region25
    $region24: #{tpu_custom_call.1} parent=1 // pred_region
      %96 = vsyncadd [#allocation11], 0
      %s97 = sshll.u32 %s5, 4
      %s98 = int_to_ptr.hbm [resolvable:$true] %s97
      %s99 = sshll.u32 [#allocation12], 4
      %s100 = int_to_ptr.vmem [resolvable:$true] %s99
      %105 = dma.hbm_to_vmem [thread:$0]  %s98, 4096, %s100, [#allocation11], 256, 256, 16
    $region25: #{tpu_custom_call.1} parent=1 // pred_fallthru
      _
    // Predicated region
    $region26: #{tpu_custom_call.1} parent=1 // pred_check
      _
    $region27: #{tpu_custom_call.1} parent=1 // pred_check_branch
      %107 = sbr.rel (0) target = $region29
    $region28: #{tpu_custom_call.1} parent=1 // pred_region
      _
    $region29: #{tpu_custom_call.1} parent=1 // pred_fallthru
      _
    // Predicated region
    $region30: #{tpu_custom_call.1} parent=1 // pred_check
      _
    $region31: #{tpu_custom_call.1} parent=1 // pred_check_branch
      %109 = sbr.rel (0) target = $region33
    $region32: #{tpu_custom_call.1} parent=1 // pred_region
      _
    $region33: #{tpu_custom_call.1} parent=1 // pred_fallthru
      _
    // Predicated region
    $region34: #{tpu_custom_call.1} parent=1 // pred_check
      _
    $region35: #{tpu_custom_call.1} parent=1 // pred_check_branch
      %111 = sbr.rel (0) target = $region37
    $region36: #{tpu_custom_call.1} parent=1 // pred_region
      _
    $region37: #{tpu_custom_call.1} parent=1 // pred_fallthru
      _
    // Predicated region
    $region38: #{tpu_custom_call.1} parent=1 // pred_check
      _
    $region39: #{tpu_custom_call.1} parent=1 // pred_check_branch
      %113 = sbr.rel (0) target = $region41
    $region40: #{tpu_custom_call.1} parent=1 // pred_region
      _
    $region41: #{tpu_custom_call.1} parent=1 // pred_fallthru
      _
    // Predicated region
    $region42: #{tpu_custom_call.1} parent=1 // pred_check
      _
    $region43: #{tpu_custom_call.1} parent=1 // pred_check_branch
      %115 = sbr.rel (0) target = $region45
    $region44: #{tpu_custom_call.1} parent=1 // pred_region
      %117 = vsyncadd [#allocation14], 0
      %s118 = sshll.u32 %s10, 4
      %s119 = int_to_ptr.hbm [resolvable:$true] %s118
      %s120 = sshll.u32 [#allocation13], 4
      %s121 = int_to_ptr.vmem [resolvable:$true] %s120
      %126 = dma.hbm_to_vmem [thread:$0]  %s119, 2048, %s121, [#allocation14], 128, 128, 8
    $region45: #{tpu_custom_call.1} parent=1 // pred_fallthru
      _
    // Predicated region
    $region46: #{tpu_custom_call.1} parent=1 // pred_check
      _
    $region47: #{tpu_custom_call.1} parent=1 // pred_check_branch
      %128 = sbr.rel (0) target = $region49
    $region48: #{tpu_custom_call.1} parent=1 // pred_region
      %130 = vsyncadd [#allocation14], 0
      %s131 = sshll.u32 %s11, 4
      %s132 = int_to_ptr.hbm [resolvable:$true] %s131
      %s133 = sshll.u32 [#allocation15], 4
      %s134 = int_to_ptr.vmem [resolvable:$true] %s133
      %139 = dma.hbm_to_vmem [thread:$0]  %s132, 2048, %s134, [#allocation14], 128, 128, 8
    $region49: #{tpu_custom_call.1} parent=1 // pred_fallthru
      _
    // Predicated region
    $region50: #{tpu_custom_call.1} parent=1 // pred_check
      _
    $region51: #{tpu_custom_call.1} parent=1 // pred_check_branch
      %141 = sbr.rel (0) target = $region53
    $region52: #{tpu_custom_call.1} parent=1 // pred_region
      %143 = vsyncadd [#allocation17], 0
      %s144 = sshll.u32 %s12, 4
      %s145 = int_to_ptr.hbm [resolvable:$true] %s144
      %s146 = sshll.u32 [#allocation16], 4
      %s147 = int_to_ptr.vmem [resolvable:$true] %s146
      %152 = dma.hbm_to_vmem [thread:$0]  %s145, 2048, %s147, [#allocation17], 128, 128, 8
    $region53: #{tpu_custom_call.1} parent=1 // pred_fallthru
      _
    // Predicated region
    $region54: #{tpu_custom_call.1} parent=1 // pred_check
      _
    $region55: #{tpu_custom_call.1} parent=1 // pred_check_branch
      %154 = sbr.rel (0) target = $region57
    $region56: #{tpu_custom_call.1} parent=1 // pred_region
      %156 = vsyncadd [#allocation17], 0
      %s157 = sshll.u32 %s13, 4
      %s158 = int_to_ptr.hbm [resolvable:$true] %s157
      %s159 = sshll.u32 [#allocation18], 4
      %s160 = int_to_ptr.vmem [resolvable:$true] %s159
      %165 = dma.hbm_to_vmem [thread:$0]  %s158, 2048, %s160, [#allocation17], 128, 128, 8
    $region57: #{tpu_custom_call.1} parent=1 // pred_fallthru
      _
    // Predicated region
    $region58: #{tpu_custom_call.1} parent=1 // pred_check
      _
    $region59: #{tpu_custom_call.1} parent=1 // pred_check_branch
      %167 = sbr.rel (0) target = $region61
    $region60: #{tpu_custom_call.1} parent=1 // pred_region
      _
    $region61: #{tpu_custom_call.1} parent=1 // pred_fallthru
      _
    // Predicated region
    $region62: #{tpu_custom_call.1} parent=1 // pred_check
      _
    $region63: #{tpu_custom_call.1} parent=1 // pred_check_branch
      %169 = sbr.rel (0) target = $region65
    $region64: #{tpu_custom_call.1} parent=1 // pred_region
      _
    $region65: #{tpu_custom_call.1} parent=1 // pred_fallthru
      _
    // Predicated region
    $region66: #{tpu_custom_call.1} parent=1 // pred_check
      _
    $region67: #{tpu_custom_call.1} parent=1 // pred_check_branch
      %171 = sbr.rel (0) target = $region69
    $region68: #{tpu_custom_call.1} parent=1 // pred_region
      _
    $region69: #{tpu_custom_call.1} parent=1 // pred_fallthru
      _
    // Predicated region
    $region70: #{tpu_custom_call.1} parent=1 // pred_check
      _
    $region71: #{tpu_custom_call.1} parent=1 // pred_check_branch
      %173 = sbr.rel (0) target = $region73
    $region72: #{tpu_custom_call.1} parent=1 // pred_region
      _
    $region73: #{tpu_custom_call.1} parent=1 // pred_fallthru
      _
    // Predicated region
    $region74: #{tpu_custom_call.1} parent=1 // pred_check
      _
    $region75: #{tpu_custom_call.1} parent=1 // pred_check_branch
      %175 = sbr.rel (0) target = $region77
    $region76: #{tpu_custom_call.1} parent=1 // pred_region
      _
    $region77: #{tpu_custom_call.1} parent=1 // pred_fallthru
      _
    // Predicated region
    $region78: #{tpu_custom_call.1} parent=1 // pred_check
      _
    $region79: #{tpu_custom_call.1} parent=1 // pred_check_branch
      %177 = sbr.rel (0) target = $region81
    $region80: #{tpu_custom_call.1} parent=1 // pred_region
      _
    $region81: #{tpu_custom_call.1} parent=1 // pred_fallthru
      _
    // Predicated region
    $region82: #{tpu_custom_call.1} parent=1 // pred_check
      _
    $region83: #{tpu_custom_call.1} parent=1 // pred_check_branch
      %179 = sbr.rel (0) target = $region85
    $region84: #{tpu_custom_call.1} parent=1 // pred_region
      _
    $region85: #{tpu_custom_call.1} parent=1 // pred_fallthru
      _
    // Predicated region
    $region86: #{tpu_custom_call.1} parent=1 // pred_check
      _
    $region87: #{tpu_custom_call.1} parent=1 // pred_check_branch
      %181 = sbr.rel (0) target = $region89
    $region88: #{tpu_custom_call.1} parent=1 // pred_region
      _
    $region89: #{tpu_custom_call.1} parent=1 // pred_fallthru
      _
    // Predicated region
    $region90: #{tpu_custom_call.1} parent=1 // pred_check
      _
    $region91: #{tpu_custom_call.1} parent=1 // pred_check_branch
      %183 = sbr.rel (0) target = $region93
    $region92: #{tpu_custom_call.1} parent=1 // pred_region
      %185 = dma.done [#allocation5], 16
    $region93: #{tpu_custom_call.1} parent=1 // pred_fallthru
      _
    // Predicated region
    $region94: #{tpu_custom_call.1} parent=1 // pred_check
      _
    $region95: #{tpu_custom_call.1} parent=1 // pred_check_branch
      %187 = sbr.rel (0) target = $region97
    $region96: #{tpu_custom_call.1} parent=1 // pred_region
      %189 = dma.done [#allocation3], 128
    $region97: #{tpu_custom_call.1} parent=1 // pred_fallthru
      _
    // Predicated region
    $region98: #{tpu_custom_call.1} parent=1 // pred_check
      _
    $region99: #{tpu_custom_call.1} parent=1 // pred_check_branch
      %191 = sbr.rel (0) target = $region101
    $region100: #{tpu_custom_call.1} parent=1 // pred_region
      %193 = dma.done [#allocation8], 4096
    $region101: #{tpu_custom_call.1} parent=1 // pred_fallthru
      _
    // Predicated region
    $region102: #{tpu_custom_call.1} parent=1 // pred_check
      _
    $region103: #{tpu_custom_call.1} parent=1 // pred_check_branch
      %195 = sbr.rel (0) target = $region105
    $region104: #{tpu_custom_call.1} parent=1 // pred_region
      %197 = dma.done [#allocation8], 4096
    $region105: #{tpu_custom_call.1} parent=1 // pred_fallthru
      _
    // Predicated region
    $region106: #{tpu_custom_call.1} parent=1 // pred_check
      _
    $region107: #{tpu_custom_call.1} parent=1 // pred_check_branch
      %199 = sbr.rel (0) target = $region109
    $region108: #{tpu_custom_call.1} parent=1 // pred_region
      %201 = dma.done [#allocation11], 4096
    $region109: #{tpu_custom_call.1} parent=1 // pred_fallthru
      _
    // Predicated region
    $region110: #{tpu_custom_call.1} parent=1 // pred_check
      _
    $region111: #{tpu_custom_call.1} parent=1 // pred_check_branch
      %203 = sbr.rel (0) target = $region113
    $region112: #{tpu_custom_call.1} parent=1 // pred_region
      %205 = dma.done [#allocation11], 4096
    $region113: #{tpu_custom_call.1} parent=1 // pred_fallthru
      _
    // Predicated region
    $region114: #{tpu_custom_call.1} parent=1 // pred_check
      _
    $region115: #{tpu_custom_call.1} parent=1 // pred_check_branch
      %207 = sbr.rel (0) target = $region117
    $region116: #{tpu_custom_call.1} parent=1 // pred_region
      %209 = dma.done [#allocation14], 2048
    $region117: #{tpu_custom_call.1} parent=1 // pred_fallthru
      _
    // Predicated region
    $region118: #{tpu_custom_call.1} parent=1 // pred_check
      _
    $region119: #{tpu_custom_call.1} parent=1 // pred_check_branch
      %211 = sbr.rel (0) target = $region121
    $region120: #{tpu_custom_call.1} parent=1 // pred_region
      %213 = dma.done [#allocation14], 2048
    $region121: #{tpu_custom_call.1} parent=1 // pred_fallthru
      _
    // Predicated region
    $region122: #{tpu_custom_call.1} parent=1 // pred_check
      _
    $region123: #{tpu_custom_call.1} parent=1 // pred_check_branch
      %215 = sbr.rel (0) target = $region125
    $region124: #{tpu_custom_call.1} parent=1 // pred_region
      %217 = dma.done [#allocation17], 2048
    $region125: #{tpu_custom_call.1} parent=1 // pred_fallthru
      _
    // Predicated region
    $region126: #{tpu_custom_call.1} parent=1 // pred_check
      _
    $region127: #{tpu_custom_call.1} parent=1 // pred_check_branch
      %219 = sbr.rel (0) target = $region129
    $region128: #{tpu_custom_call.1} parent=1 // pred_region
      %221 = dma.done [#allocation17], 2048
    $region129: #{tpu_custom_call.1} parent=1 // pred_fallthru
      _
    %222 = sfence
    %s223 = sld [smem:[#allocation2]]
    %s224 = sld [smem:[#allocation2 + $0x1]]
    %s225 = sld [smem:[#allocation2 + $0x2]]
    %s226 = sld [smem:[#allocation2 + $0x3]]
    %s227 = sld [smem:[#allocation2 + $0x4]]
    %s228 = smul.f32 %s223, -2.0
    %v229 = vstv %s228
    %v230 = vmul.f32 %v229, 1.442695
    %v231 = vpow.pop %v230
    %s232 = vtos %v231
    %s233 = smul.f32 %s232, 0.5
    %v234 = vld [vmem:[#allocation6] sm:$0xff]
    %v235 = vld [vmem:[#allocation7] sm:$0xff]
    %v236 = vld [vmem:[#allocation7 + $0x8] sm:$0xff]
    %v237 = vld [vmem:[#allocation7 + $0x10] sm:$0xff]
    %v238 = vld [vmem:[#allocation7 + $0x18] sm:$0xff]
    %v239 = vld [vmem:[#allocation7 + $0x20] sm:$0xff]
    %v240 = vld [vmem:[#allocation7 + $0x28] sm:$0xff]
    %v241 = vld [vmem:[#allocation7 + $0x30] sm:$0xff]
    %v242 = vld [vmem:[#allocation7 + $0x38] sm:$0xff]
    %v243 = vld [vmem:[#allocation7 + $0x40] sm:$0xff]
    %v244 = vld [vmem:[#allocation7 + $0x48] sm:$0xff]
    %v245 = vld [vmem:[#allocation7 + $0x50] sm:$0xff]
    %v246 = vld [vmem:[#allocation7 + $0x58] sm:$0xff]
    %v247 = vld [vmem:[#allocation7 + $0x60] sm:$0xff]
    %v248 = vld [vmem:[#allocation7 + $0x68] sm:$0xff]
    %v249 = vld [vmem:[#allocation7 + $0x70] sm:$0xff]
    %v250 = vld [vmem:[#allocation7 + $0x78] sm:$0xff]
    %v251 = vld [vmem:[#allocation7 + $0x80] sm:$0xff]
    %v252 = vld [vmem:[#allocation7 + $0x88] sm:$0xff]
    %v253 = vld [vmem:[#allocation7 + $0x90] sm:$0xff]
    %v254 = vld [vmem:[#allocation7 + $0x98] sm:$0xff]
    %v255 = vld [vmem:[#allocation7 + $0xa0] sm:$0xff]
    %v256 = vld [vmem:[#allocation7 + $0xa8] sm:$0xff]
    %v257 = vld [vmem:[#allocation7 + $0xb0] sm:$0xff]
    %v258 = vld [vmem:[#allocation7 + $0xb8] sm:$0xff]
    %v259 = vld [vmem:[#allocation7 + $0xc0] sm:$0xff]
    %v260 = vld [vmem:[#allocation7 + $0xc8] sm:$0xff]
    %v261 = vld [vmem:[#allocation7 + $0xd0] sm:$0xff]
    %v262 = vld [vmem:[#allocation7 + $0xd8] sm:$0xff]
    %v263 = vld [vmem:[#allocation7 + $0xe0] sm:$0xff]
    %v264 = vld [vmem:[#allocation7 + $0xe8] sm:$0xff]
    %v265 = vld [vmem:[#allocation7 + $0xf0] sm:$0xff]
    %v266 = vld [vmem:[#allocation7 + $0xf8] sm:$0xff]
    %v267 = vld [vmem:[#allocation9] sm:$0xff]
    %v268 = vld [vmem:[#allocation9 + $0x8] sm:$0xff]
    %v269 = vld [vmem:[#allocation9 + $0x10] sm:$0xff]
    %v270 = vld [vmem:[#allocation9 + $0x18] sm:$0xff]
    %v271 = vld [vmem:[#allocation9 + $0x20] sm:$0xff]
    %v272 = vld [vmem:[#allocation9 + $0x28] sm:$0xff]
    %v273 = vld [vmem:[#allocation9 + $0x30] sm:$0xff]
    %v274 = vld [vmem:[#allocation9 + $0x38] sm:$0xff]
    %v275 = vld [vmem:[#allocation9 + $0x40] sm:$0xff]
    %v276 = vld [vmem:[#allocation9 + $0x48] sm:$0xff]
    %v277 = vld [vmem:[#allocation9 + $0x50] sm:$0xff]
    %v278 = vld [vmem:[#allocation9 + $0x58] sm:$0xff]
    %v279 = vld [vmem:[#allocation9 + $0x60] sm:$0xff]
    %v280 = vld [vmem:[#allocation9 + $0x68] sm:$0xff]
    %v281 = vld [vmem:[#allocation9 + $0x70] sm:$0xff]
    %v282 = vld [vmem:[#allocation9 + $0x78] sm:$0xff]
    %v283 = vld [vmem:[#allocation9 + $0x80] sm:$0xff]
    %v284 = vld [vmem:[#allocation9 + $0x88] sm:$0xff]
    %v285 = vld [vmem:[#allocation9 + $0x90] sm:$0xff]
    %v286 = vld [vmem:[#allocation9 + $0x98] sm:$0xff]
    %v287 = vld [vmem:[#allocation9 + $0xa0] sm:$0xff]
    %v288 = vld [vmem:[#allocation9 + $0xa8] sm:$0xff]
    %v289 = vld [vmem:[#allocation9 + $0xb0] sm:$0xff]
    %v290 = vld [vmem:[#allocation9 + $0xb8] sm:$0xff]
    %v291 = vld [vmem:[#allocation9 + $0xc0] sm:$0xff]
    %v292 = vld [vmem:[#allocation9 + $0xc8] sm:$0xff]
    %v293 = vld [vmem:[#allocation9 + $0xd0] sm:$0xff]
    %v294 = vld [vmem:[#allocation9 + $0xd8] sm:$0xff]
    %v295 = vld [vmem:[#allocation9 + $0xe0] sm:$0xff]
    %v296 = vld [vmem:[#allocation9 + $0xe8] sm:$0xff]
    %v297 = vld [vmem:[#allocation9 + $0xf0] sm:$0xff]
    %v298 = vld [vmem:[#allocation9 + $0xf8] sm:$0xff]
    %v299 = vld [vmem:[#allocation10] sm:$0xff]
    %v300 = vld [vmem:[#allocation10 + $0x8] sm:$0xff]
    %v301 = vld [vmem:[#allocation10 + $0x10] sm:$0xff]
    %v302 = vld [vmem:[#allocation10 + $0x18] sm:$0xff]
    %v303 = vld [vmem:[#allocation10 + $0x20] sm:$0xff]
    %v304 = vld [vmem:[#allocation10 + $0x28] sm:$0xff]
    %v305 = vld [vmem:[#allocation10 + $0x30] sm:$0xff]
    %v306 = vld [vmem:[#allocation10 + $0x38] sm:$0xff]
    %v307 = vld [vmem:[#allocation10 + $0x40] sm:$0xff]
    %v308 = vld [vmem:[#allocation10 + $0x48] sm:$0xff]
    %v309 = vld [vmem:[#allocation10 + $0x50] sm:$0xff]
    %v310 = vld [vmem:[#allocation10 + $0x58] sm:$0xff]
    %v311 = vld [vmem:[#allocation10 + $0x60] sm:$0xff]
    %v312 = vld [vmem:[#allocation10 + $0x68] sm:$0xff]
    %v313 = vld [vmem:[#allocation10 + $0x70] sm:$0xff]
    %v314 = vld [vmem:[#allocation10 + $0x78] sm:$0xff]
    %v315 = vld [vmem:[#allocation10 + $0x80] sm:$0xff]
    %v316 = vld [vmem:[#allocation10 + $0x88] sm:$0xff]
    %v317 = vld [vmem:[#allocation10 + $0x90] sm:$0xff]
    %v318 = vld [vmem:[#allocation10 + $0x98] sm:$0xff]
    %v319 = vld [vmem:[#allocation10 + $0xa0] sm:$0xff]
    %v320 = vld [vmem:[#allocation10 + $0xa8] sm:$0xff]
    %v321 = vld [vmem:[#allocation10 + $0xb0] sm:$0xff]
    %v322 = vld [vmem:[#allocation10 + $0xb8] sm:$0xff]
    %v323 = vld [vmem:[#allocation10 + $0xc0] sm:$0xff]
    %v324 = vld [vmem:[#allocation10 + $0xc8] sm:$0xff]
    %v325 = vld [vmem:[#allocation10 + $0xd0] sm:$0xff]
    %v326 = vld [vmem:[#allocation10 + $0xd8] sm:$0xff]
    %v327 = vld [vmem:[#allocation10 + $0xe0] sm:$0xff]
    %v328 = vld [vmem:[#allocation10 + $0xe8] sm:$0xff]
    %v329 = vld [vmem:[#allocation10 + $0xf0] sm:$0xff]
    %v330 = vld [vmem:[#allocation10 + $0xf8] sm:$0xff]
    %v331 = vld [vmem:[#allocation12] sm:$0xff]
    %v332 = vld [vmem:[#allocation12 + $0x8] sm:$0xff]
    %v333 = vld [vmem:[#allocation12 + $0x10] sm:$0xff]
    %v334 = vld [vmem:[#allocation12 + $0x18] sm:$0xff]
    %v335 = vld [vmem:[#allocation12 + $0x20] sm:$0xff]
    %v336 = vld [vmem:[#allocation12 + $0x28] sm:$0xff]
    %v337 = vld [vmem:[#allocation12 + $0x30] sm:$0xff]
    %v338 = vld [vmem:[#allocation12 + $0x38] sm:$0xff]
    %v339 = vld [vmem:[#allocation12 + $0x40] sm:$0xff]
    %v340 = vld [vmem:[#allocation12 + $0x48] sm:$0xff]
    %v341 = vld [vmem:[#allocation12 + $0x50] sm:$0xff]
    %v342 = vld [vmem:[#allocation12 + $0x58] sm:$0xff]
    %v343 = vld [vmem:[#allocation12 + $0x60] sm:$0xff]
    %v344 = vld [vmem:[#allocation12 + $0x68] sm:$0xff]
    %v345 = vld [vmem:[#allocation12 + $0x70] sm:$0xff]
    %v346 = vld [vmem:[#allocation12 + $0x78] sm:$0xff]
    %v347 = vld [vmem:[#allocation12 + $0x80] sm:$0xff]
    %v348 = vld [vmem:[#allocation12 + $0x88] sm:$0xff]
    %v349 = vld [vmem:[#allocation12 + $0x90] sm:$0xff]
    %v350 = vld [vmem:[#allocation12 + $0x98] sm:$0xff]
    %v351 = vld [vmem:[#allocation12 + $0xa0] sm:$0xff]
    %v352 = vld [vmem:[#allocation12 + $0xa8] sm:$0xff]
    %v353 = vld [vmem:[#allocation12 + $0xb0] sm:$0xff]
    %v354 = vld [vmem:[#allocation12 + $0xb8] sm:$0xff]
    %v355 = vld [vmem:[#allocation12 + $0xc0] sm:$0xff]
    %v356 = vld [vmem:[#allocation12 + $0xc8] sm:$0xff]
    %v357 = vld [vmem:[#allocation12 + $0xd0] sm:$0xff]
    %v358 = vld [vmem:[#allocation12 + $0xd8] sm:$0xff]
    %v359 = vld [vmem:[#allocation12 + $0xe0] sm:$0xff]
    %v360 = vld [vmem:[#allocation12 + $0xe8] sm:$0xff]
    %v361 = vld [vmem:[#allocation12 + $0xf0] sm:$0xff]
    %v362 = vld [vmem:[#allocation12 + $0xf8] sm:$0xff]
    %v363 = vmul.f32 %v267, 1.442695
    %v364 = vpow.pop %v363
    %v365 = vmul.f32 %v268, 1.442695
    %v366 = vpow.pop %v365
    %v367 = vmul.f32 %v269, 1.442695
    %v368 = vpow.pop %v367
    %v369 = vmul.f32 %v270, 1.442695
    %v370 = vpow.pop %v369
    %v371 = vmul.f32 %v271, 1.442695
    %v372 = vpow.pop %v371
    %v373 = vmul.f32 %v272, 1.442695
    %v374 = vpow.pop %v373
    %v375 = vmul.f32 %v273, 1.442695
    %v376 = vpow.pop %v375
    %v377 = vmul.f32 %v274, 1.442695
    %v378 = vpow.pop %v377
    %v379 = vmul.f32 %v275, 1.442695
    %v380 = vpow.pop %v379
    %v381 = vmul.f32 %v276, 1.442695
    %v382 = vpow.pop %v381
    %v383 = vmul.f32 %v277, 1.442695
    %v384 = vpow.pop %v383
    %v385 = vmul.f32 %v278, 1.442695
    %v386 = vpow.pop %v385
    %v387 = vmul.f32 %v279, 1.442695
    %v388 = vpow.pop %v387
    %v389 = vmul.f32 %v280, 1.442695
    %v390 = vpow.pop %v389
    %v391 = vmul.f32 %v281, 1.442695
    %v392 = vpow.pop %v391
    %v393 = vmul.f32 %v282, 1.442695
    %v394 = vpow.pop %v393
    %v395 = vmul.f32 %v283, 1.442695
    %v396 = vpow.pop %v395
    %v397 = vmul.f32 %v284, 1.442695
    %v398 = vpow.pop %v397
    %v399 = vmul.f32 %v285, 1.442695
    %v400 = vpow.pop %v399
    %v401 = vmul.f32 %v286, 1.442695
    %v402 = vpow.pop %v401
    %v403 = vmul.f32 %v287, 1.442695
    %v404 = vpow.pop %v403
    %v405 = vmul.f32 %v288, 1.442695
    %v406 = vpow.pop %v405
    %v407 = vmul.f32 %v289, 1.442695
    %v408 = vpow.pop %v407
    %v409 = vmul.f32 %v290, 1.442695
    %v410 = vpow.pop %v409
    %v411 = vmul.f32 %v291, 1.442695
    %v412 = vpow.pop %v411
    %v413 = vmul.f32 %v292, 1.442695
    %v414 = vpow.pop %v413
    %v415 = vmul.f32 %v293, 1.442695
    %v416 = vpow.pop %v415
    %v417 = vmul.f32 %v294, 1.442695
    %v418 = vpow.pop %v417
    %v419 = vmul.f32 %v295, 1.442695
    %v420 = vpow.pop %v419
    %v421 = vmul.f32 %v296, 1.442695
    %v422 = vpow.pop %v421
    %v423 = vmul.f32 %v297, 1.442695
    %v424 = vpow.pop %v423
    %v425 = vmul.f32 %v298, 1.442695
    %v426 = vpow.pop %v425
    %v427 = vmul.f32 %v364, %v331
    %v428 = vmul.f32 %v366, %v332
    %v429 = vmul.f32 %v368, %v333
    %v430 = vmul.f32 %v370, %v334
    %v431 = vmul.f32 %v372, %v335
    %v432 = vmul.f32 %v374, %v336
    %v433 = vmul.f32 %v376, %v337
    %v434 = vmul.f32 %v378, %v338
    %v435 = vmul.f32 %v380, %v339
    %v436 = vmul.f32 %v382, %v340
    %v437 = vmul.f32 %v384, %v341
    %v438 = vmul.f32 %v386, %v342
    %v439 = vmul.f32 %v388, %v343
    %v440 = vmul.f32 %v390, %v344
    %v441 = vmul.f32 %v392, %v345
    %v442 = vmul.f32 %v394, %v346
    %v443 = vmul.f32 %v396, %v347
    %v444 = vmul.f32 %v398, %v348
    %v445 = vmul.f32 %v400, %v349
    %v446 = vmul.f32 %v402, %v350
    %v447 = vmul.f32 %v404, %v351
    %v448 = vmul.f32 %v406, %v352
    %v449 = vmul.f32 %v408, %v353
    %v450 = vmul.f32 %v410, %v354
    %v451 = vmul.f32 %v412, %v355
    %v452 = vmul.f32 %v414, %v356
    %v453 = vmul.f32 %v416, %v357
    %v454 = vmul.f32 %v418, %v358
    %v455 = vmul.f32 %v420, %v359
    %v456 = vmul.f32 %v422, %v360
    %v457 = vmul.f32 %v424, %v361
    %v458 = vmul.f32 %v426, %v362
    %v459 = vadd.f32 %v235, %v427
    %v460 = vadd.f32 %v236, %v428
    %v461 = vadd.f32 %v237, %v429
    %v462 = vadd.f32 %v238, %v430
    %v463 = vadd.f32 %v239, %v431
    %v464 = vadd.f32 %v240, %v432
    %v465 = vadd.f32 %v241, %v433
    %v466 = vadd.f32 %v242, %v434
    %v467 = vadd.f32 %v243, %v435
    %v468 = vadd.f32 %v244, %v436
    %v469 = vadd.f32 %v245, %v437
    %v470 = vadd.f32 %v246, %v438
    %v471 = vadd.f32 %v247, %v439
    %v472 = vadd.f32 %v248, %v440
    %v473 = vadd.f32 %v249, %v441
    %v474 = vadd.f32 %v250, %v442
    %v475 = vadd.f32 %v251, %v443
    %v476 = vadd.f32 %v252, %v444
    %v477 = vadd.f32 %v253, %v445
    %v478 = vadd.f32 %v254, %v446
    %v479 = vadd.f32 %v255, %v447
    %v480 = vadd.f32 %v256, %v448
    %v481 = vadd.f32 %v257, %v449
    %v482 = vadd.f32 %v258, %v450
    %v483 = vadd.f32 %v259, %v451
    %v484 = vadd.f32 %v260, %v452
    %v485 = vadd.f32 %v261, %v453
    %v486 = vadd.f32 %v262, %v454
    %v487 = vadd.f32 %v263, %v455
    %v488 = vadd.f32 %v264, %v456
    %v489 = vadd.f32 %v265, %v457
    %v490 = vadd.f32 %v266, %v458
    %v491 = vmul.f32 %v364, %v364
    %v492 = vmul.f32 %v366, %v366
    %v493 = vmul.f32 %v368, %v368
    %v494 = vmul.f32 %v370, %v370
    %v495 = vmul.f32 %v372, %v372
    %v496 = vmul.f32 %v374, %v374
    %v497 = vmul.f32 %v376, %v376
    %v498 = vmul.f32 %v378, %v378
    %v499 = vmul.f32 %v380, %v380
    %v500 = vmul.f32 %v382, %v382
    %v501 = vmul.f32 %v384, %v384
    %v502 = vmul.f32 %v386, %v386
    %v503 = vmul.f32 %v388, %v388
    %v504 = vmul.f32 %v390, %v390
    %v505 = vmul.f32 %v392, %v392
    %v506 = vmul.f32 %v394, %v394
    %v507 = vmul.f32 %v396, %v396
    %v508 = vmul.f32 %v398, %v398
    %v509 = vmul.f32 %v400, %v400
    %v510 = vmul.f32 %v402, %v402
    %v511 = vmul.f32 %v404, %v404
    %v512 = vmul.f32 %v406, %v406
    %v513 = vmul.f32 %v408, %v408
    %v514 = vmul.f32 %v410, %v410
    %v515 = vmul.f32 %v412, %v412
    %v516 = vmul.f32 %v414, %v414
    %v517 = vmul.f32 %v416, %v416
    %v518 = vmul.f32 %v418, %v418
    %v519 = vmul.f32 %v420, %v420
    %v520 = vmul.f32 %v422, %v422
    %v521 = vmul.f32 %v424, %v424
    %v522 = vmul.f32 %v426, %v426
    %v523 = vsub.f32 %v235, %v299
    %v524 = vsub.f32 %v236, %v300
    %v525 = vsub.f32 %v237, %v301
    %v526 = vsub.f32 %v238, %v302
    %v527 = vsub.f32 %v239, %v303
    %v528 = vsub.f32 %v240, %v304
    %v529 = vsub.f32 %v241, %v305
    %v530 = vsub.f32 %v242, %v306
    %v531 = vsub.f32 %v243, %v307
    %v532 = vsub.f32 %v244, %v308
    %v533 = vsub.f32 %v245, %v309
    %v534 = vsub.f32 %v246, %v310
    %v535 = vsub.f32 %v247, %v311
    %v536 = vsub.f32 %v248, %v312
    %v537 = vsub.f32 %v249, %v313
    %v538 = vsub.f32 %v250, %v314
    %v539 = vsub.f32 %v251, %v315
    %v540 = vsub.f32 %v252, %v316
    %v541 = vsub.f32 %v253, %v317
    %v542 = vsub.f32 %v254, %v318
    %v543 = vsub.f32 %v255, %v319
    %v544 = vsub.f32 %v256, %v320
    %v545 = vsub.f32 %v257, %v321
    %v546 = vsub.f32 %v258, %v322
    %v547 = vsub.f32 %v259, %v323
    %v548 = vsub.f32 %v260, %v324
    %v549 = vsub.f32 %v261, %v325
    %v550 = vsub.f32 %v262, %v326
    %v551 = vsub.f32 %v263, %v327
    %v552 = vsub.f32 %v264, %v328
    %v553 = vsub.f32 %v265, %v329
    %v554 = vsub.f32 %v266, %v330
    %v555 = vmul.f32 %v523, %v523
    %v556 = vmul.f32 %v524, %v524
    %v557 = vmul.f32 %v525, %v525
    %v558 = vmul.f32 %v526, %v526
    %v559 = vmul.f32 %v527, %v527
    %v560 = vmul.f32 %v528, %v528
    %v561 = vmul.f32 %v529, %v529
    %v562 = vmul.f32 %v530, %v530
    %v563 = vmul.f32 %v531, %v531
    %v564 = vmul.f32 %v532, %v532
    %v565 = vmul.f32 %v533, %v533
    %v566 = vmul.f32 %v534, %v534
    %v567 = vmul.f32 %v535, %v535
    %v568 = vmul.f32 %v536, %v536
    %v569 = vmul.f32 %v537, %v537
    %v570 = vmul.f32 %v538, %v538
    %v571 = vmul.f32 %v539, %v539
    %v572 = vmul.f32 %v540, %v540
    %v573 = vmul.f32 %v541, %v541
    %v574 = vmul.f32 %v542, %v542
    %v575 = vmul.f32 %v543, %v543
    %v576 = vmul.f32 %v544, %v544
    %v577 = vmul.f32 %v545, %v545
    %v578 = vmul.f32 %v546, %v546
    %v579 = vmul.f32 %v547, %v547
    %v580 = vmul.f32 %v548, %v548
    %v581 = vmul.f32 %v549, %v549
    %v582 = vmul.f32 %v550, %v550
    %v583 = vmul.f32 %v551, %v551
    %v584 = vmul.f32 %v552, %v552
    %v585 = vmul.f32 %v553, %v553
    %v586 = vmul.f32 %v554, %v554
    %v587 = vadd.f32 %v491, %v555
    %v588 = vadd.f32 %v492, %v556
    %v589 = vadd.f32 %v493, %v557
    %v590 = vadd.f32 %v494, %v558
    %v591 = vadd.f32 %v495, %v559
    %v592 = vadd.f32 %v496, %v560
    %v593 = vadd.f32 %v497, %v561
    %v594 = vadd.f32 %v498, %v562
    %v595 = vadd.f32 %v499, %v563
    %v596 = vadd.f32 %v500, %v564
    %v597 = vadd.f32 %v501, %v565
    %v598 = vadd.f32 %v502, %v566
    %v599 = vadd.f32 %v503, %v567
    %v600 = vadd.f32 %v504, %v568
    %v601 = vadd.f32 %v505, %v569
    %v602 = vadd.f32 %v506, %v570
    %v603 = vadd.f32 %v507, %v571
    %v604 = vadd.f32 %v508, %v572
    %v605 = vadd.f32 %v509, %v573
    %v606 = vadd.f32 %v510, %v574
    %v607 = vadd.f32 %v511, %v575
    %v608 = vadd.f32 %v512, %v576
    %v609 = vadd.f32 %v513, %v577
    %v610 = vadd.f32 %v514, %v578
    %v611 = vadd.f32 %v515, %v579
    %v612 = vadd.f32 %v516, %v580
    %v613 = vadd.f32 %v517, %v581
    %v614 = vadd.f32 %v518, %v582
    %v615 = vadd.f32 %v519, %v583
    %v616 = vadd.f32 %v520, %v584
    %v617 = vadd.f32 %v521, %v585
    %v618 = vadd.f32 %v522, %v586
    %v619 = vadd.f32 %v587, %v589
    %v620 = vadd.f32 %v619, %v591
    %v621 = vadd.f32 %v620, %v593
    %v622 = vadd.f32 %v621, %v595
    %v623 = vadd.f32 %v622, %v597
    %v624 = vadd.f32 %v623, %v599
    %v625 = vadd.f32 %v624, %v601
    %v626 = vadd.f32 %v625, %v603
    %v627 = vadd.f32 %v626, %v605
    %v628 = vadd.f32 %v627, %v607
    %v629 = vadd.f32 %v628, %v609
    %v630 = vadd.f32 %v629, %v611
    %v631 = vadd.f32 %v630, %v613
    %v632 = vadd.f32 %v631, %v615
    %v633 = vadd.f32 %v632, %v617
    %v634 = vrot.slane %v633, 4
    %v635 = vadd.f32 %v633, %v634
    %v636 = vrot.slane %v635, 2
    %v637 = vadd.f32 %v635, %v636
    %v638 = vrot.slane %v637, 1
    %v639 = vadd.f32 %v637, %v638
    %v640 = vadd.f32 %v588, %v590
    %v641 = vadd.f32 %v640, %v592
    %v642 = vadd.f32 %v641, %v594
    %v643 = vadd.f32 %v642, %v596
    %v644 = vadd.f32 %v643, %v598
    %v645 = vadd.f32 %v644, %v600
    %v646 = vadd.f32 %v645, %v602
    %v647 = vadd.f32 %v646, %v604
    %v648 = vadd.f32 %v647, %v606
    %v649 = vadd.f32 %v648, %v608
    %v650 = vadd.f32 %v649, %v610
    %v651 = vadd.f32 %v650, %v612
    %v652 = vadd.f32 %v651, %v614
    %v653 = vadd.f32 %v652, %v616
    %v654 = vadd.f32 %v653, %v618
    %v655 = vrot.slane %v654, 4
    %v656 = vadd.f32 %v654, %v655
    %v657 = vrot.slane %v656, 2
    %v658 = vadd.f32 %v656, %v657
    %v659 = vrot.slane %v658, 1
    %v660 = vadd.f32 %v658, %v659
    %v661 = vadd.f32 %v267, %v269
    %v662 = vadd.f32 %v661, %v271
    %v663 = vadd.f32 %v662, %v273
    %v664 = vadd.f32 %v663, %v275
    %v665 = vadd.f32 %v664, %v277
    %v666 = vadd.f32 %v665, %v279
    %v667 = vadd.f32 %v666, %v281
    %v668 = vadd.f32 %v667, %v283
    %v669 = vadd.f32 %v668, %v285
    %v670 = vadd.f32 %v669, %v287
    %v671 = vadd.f32 %v670, %v289
    %v672 = vadd.f32 %v671, %v291
    %v673 = vadd.f32 %v672, %v293
    %v674 = vadd.f32 %v673, %v295
    %v675 = vadd.f32 %v674, %v297
    %v676 = vrot.slane %v675, 4
    %v677 = vadd.f32 %v675, %v676
    %v678 = vrot.slane %v677, 2
    %v679 = vadd.f32 %v677, %v678
    %v680 = vrot.slane %v679, 1
    %v681 = vadd.f32 %v679, %v680
    %v682 = vadd.f32 %v268, %v270
    %v683 = vadd.f32 %v682, %v272
    %v684 = vadd.f32 %v683, %v274
    %v685 = vadd.f32 %v684, %v276
    %v686 = vadd.f32 %v685, %v278
    %v687 = vadd.f32 %v686, %v280
    %v688 = vadd.f32 %v687, %v282
    %v689 = vadd.f32 %v688, %v284
    %v690 = vadd.f32 %v689, %v286
    %v691 = vadd.f32 %v690, %v288
    %v692 = vadd.f32 %v691, %v290
    %v693 = vadd.f32 %v692, %v292
    %v694 = vadd.f32 %v693, %v294
    %v695 = vadd.f32 %v694, %v296
    %v696 = vadd.f32 %v695, %v298
    %v697 = vrot.slane %v696, 4
    %v698 = vadd.f32 %v696, %v697
    %v699 = vrot.slane %v698, 2
    %v700 = vadd.f32 %v698, %v699
    %v701 = vrot.slane %v700, 1
    %v702 = vadd.f32 %v700, %v701
    %v703 = vadd.f32 %v639, 0.0
    %v704 = vadd.f32 %v660, 0.0
    %v705 = vadd.f32 %v681, 0.0
    %v706 = vadd.f32 %v702, 0.0
    %v707 = vld [vmem:[%s6] sm:$0x1]
    %v708 = vld [vmem:[%s7] sm:$0x1]
    %v709 = vld [vmem:[%s8] sm:$0x1]
    %v710 = vld [vmem:[%s9] sm:$0x1]
    %v711 = vmul.f32 %v708, 1.442695
    %v712 = vpow.pop %v711
    %v713 = vmul.f32 %v712, %v710
    %v714 = vadd.f32 %v707, %v713
    %v715 = vmul.f32 %v712, %v712
    %v716 = vsub.f32 %v707, %v709
    %v717 = vmul.f32 %v716, %v716
    %v718 = vadd.f32 %v715, %v717
    %v719 = vadd.f32 %v718, 0.0
    %v720 = vadd.f32 %v708, 0.0
    %v721 = vadd.f32 %v719, 0.0
    %v722 = vadd.f32 %v720, 0.0
    %v724 = vperm.slane %v714, 0
    %727 = vst [vmem:[#allocation1] ss:$2 sm:$0xff] %v234
    %v728 = vld.sshfl [vmem:[#allocation1] sm:$0xff pattern:$0x75316420]
    %v729 = vld.sshfl [vmem:[#allocation1 + $0x8] sm:$0xff pattern:$0x75316420]
    %732 = vmatpush.xpose.msra.mxu0 %v489
    %733 = vmatpush.xpose.msra.mxu0 %v487
    %734 = vmatpush.xpose.msra.mxu0 %v485
    %735 = vmatpush.xpose.msra.mxu0 %v483
    %736 = vmatpush.xpose.msra.mxu0 %v481
    %737 = vmatpush.xpose.msra.mxu0 %v479
    %738 = vmatpush.xpose.msra.mxu0 %v477
    %739 = vmatpush.xpose.msra.mxu0 %v475
    %740 = vmatpush.xpose.msra.mxu0 %v473
    %741 = vmatpush.xpose.msra.mxu0 %v471
    %742 = vmatpush.xpose.msra.mxu0 %v469
    %743 = vmatpush.xpose.msra.mxu0 %v467
    %744 = vmatpush.xpose.msra.mxu0 %v465
    %745 = vmatpush.xpose.msra.mxu0 %v463
    %746 = vmatpush.xpose.msra.mxu0 %v461
    %747 = vmatpush.xpose.msra.mxu0 %v459
    %748 = vmatmul.f32.gmra.mxu0 %v728
    %v749 = vpop.f32.mrf.mxu0
    %v750 = vadd.f32 %v724, %v749
    %751 = vdwg.mxu0
    %752 = vmatpush.xpose.msra.mxu0 %v490
    %753 = vmatpush.xpose.msra.mxu0 %v488
    %754 = vmatpush.xpose.msra.mxu0 %v486
    %755 = vmatpush.xpose.msra.mxu0 %v484
    %756 = vmatpush.xpose.msra.mxu0 %v482
    %757 = vmatpush.xpose.msra.mxu0 %v480
    %758 = vmatpush.xpose.msra.mxu0 %v478
    %759 = vmatpush.xpose.msra.mxu0 %v476
    %760 = vmatpush.xpose.msra.mxu0 %v474
    %761 = vmatpush.xpose.msra.mxu0 %v472
    %762 = vmatpush.xpose.msra.mxu0 %v470
    %763 = vmatpush.xpose.msra.mxu0 %v468
    %764 = vmatpush.xpose.msra.mxu0 %v466
    %765 = vmatpush.xpose.msra.mxu0 %v464
    %766 = vmatpush.xpose.msra.mxu0 %v462
    %767 = vmatpush.xpose.msra.mxu0 %v460
    %768 = vmatmul.f32.gmra.mxu0 %v729
    %v769 = vpop.f32.mrf.mxu0
    %v770 = vadd.f32 %v750, %v769
    %771 = vdwg.mxu0
    %v772 = vmax.f32 %v770, 0.0
    %v773 = vld [vmem:[#allocation13] sm:$0xff]
    %v774 = vld [vmem:[#allocation13 + $0x8] sm:$0xff]
    %v775 = vld [vmem:[#allocation13 + $0x10] sm:$0xff]
    %v776 = vld [vmem:[#allocation13 + $0x18] sm:$0xff]
    %v777 = vld [vmem:[#allocation13 + $0x20] sm:$0xff]
    %v778 = vld [vmem:[#allocation13 + $0x28] sm:$0xff]
    %v779 = vld [vmem:[#allocation13 + $0x30] sm:$0xff]
    %v780 = vld [vmem:[#allocation13 + $0x38] sm:$0xff]
    %v781 = vld [vmem:[#allocation13 + $0x40] sm:$0xff]
    %v782 = vld [vmem:[#allocation13 + $0x48] sm:$0xff]
    %v783 = vld [vmem:[#allocation13 + $0x50] sm:$0xff]
    %v784 = vld [vmem:[#allocation13 + $0x58] sm:$0xff]
    %v785 = vld [vmem:[#allocation13 + $0x60] sm:$0xff]
    %v786 = vld [vmem:[#allocation13 + $0x68] sm:$0xff]
    %v787 = vld [vmem:[#allocation13 + $0x70] sm:$0xff]
    %v788 = vld [vmem:[#allocation13 + $0x78] sm:$0xff]
    %v789 = vld [vmem:[#allocation15] sm:$0xff]
    %v790 = vld [vmem:[#allocation15 + $0x8] sm:$0xff]
    %v791 = vld [vmem:[#allocation15 + $0x10] sm:$0xff]
    %v792 = vld [vmem:[#allocation15 + $0x18] sm:$0xff]
    %v793 = vld [vmem:[#allocation15 + $0x20] sm:$0xff]
    %v794 = vld [vmem:[#allocation15 + $0x28] sm:$0xff]
    %v795 = vld [vmem:[#allocation15 + $0x30] sm:$0xff]
    %v796 = vld [vmem:[#allocation15 + $0x38] sm:$0xff]
    %v797 = vld [vmem:[#allocation15 + $0x40] sm:$0xff]
    %v798 = vld [vmem:[#allocation15 + $0x48] sm:$0xff]
    %v799 = vld [vmem:[#allocation15 + $0x50] sm:$0xff]
    %v800 = vld [vmem:[#allocation15 + $0x58] sm:$0xff]
    %v801 = vld [vmem:[#allocation15 + $0x60] sm:$0xff]
    %v802 = vld [vmem:[#allocation15 + $0x68] sm:$0xff]
    %v803 = vld [vmem:[#allocation15 + $0x70] sm:$0xff]
    %v804 = vld [vmem:[#allocation15 + $0x78] sm:$0xff]
    %v805 = vld [vmem:[#allocation16] sm:$0xff]
    %v806 = vld [vmem:[#allocation16 + $0x8] sm:$0xff]
    %v807 = vld [vmem:[#allocation16 + $0x10] sm:$0xff]
    %v808 = vld [vmem:[#allocation16 + $0x18] sm:$0xff]
    %v809 = vld [vmem:[#allocation16 + $0x20] sm:$0xff]
    %v810 = vld [vmem:[#allocation16 + $0x28] sm:$0xff]
    %v811 = vld [vmem:[#allocation16 + $0x30] sm:$0xff]
    %v812 = vld [vmem:[#allocation16 + $0x38] sm:$0xff]
    %v813 = vld [vmem:[#allocation16 + $0x40] sm:$0xff]
    %v814 = vld [vmem:[#allocation16 + $0x48] sm:$0xff]
    %v815 = vld [vmem:[#allocation16 + $0x50] sm:$0xff]
    %v816 = vld [vmem:[#allocation16 + $0x58] sm:$0xff]
    %v817 = vld [vmem:[#allocation16 + $0x60] sm:$0xff]
    %v818 = vld [vmem:[#allocation16 + $0x68] sm:$0xff]
    %v819 = vld [vmem:[#allocation16 + $0x70] sm:$0xff]
    %v820 = vld [vmem:[#allocation16 + $0x78] sm:$0xff]
    %v821 = vld [vmem:[#allocation18] sm:$0xff]
    %v822 = vld [vmem:[#allocation18 + $0x8] sm:$0xff]
    %v823 = vld [vmem:[#allocation18 + $0x10] sm:$0xff]
    %v824 = vld [vmem:[#allocation18 + $0x18] sm:$0xff]
    %v825 = vld [vmem:[#allocation18 + $0x20] sm:$0xff]
    %v826 = vld [vmem:[#allocation18 + $0x28] sm:$0xff]
    %v827 = vld [vmem:[#allocation18 + $0x30] sm:$0xff]
    %v828 = vld [vmem:[#allocation18 + $0x38] sm:$0xff]
    %v829 = vld [vmem:[#allocation18 + $0x40] sm:$0xff]
    %v830 = vld [vmem:[#allocation18 + $0x48] sm:$0xff]
    %v831 = vld [vmem:[#allocation18 + $0x50] sm:$0xff]
    %v832 = vld [vmem:[#allocation18 + $0x58] sm:$0xff]
    %v833 = vld [vmem:[#allocation18 + $0x60] sm:$0xff]
    %v834 = vld [vmem:[#allocation18 + $0x68] sm:$0xff]
    %v835 = vld [vmem:[#allocation18 + $0x70] sm:$0xff]
    %v836 = vld [vmem:[#allocation18 + $0x78] sm:$0xff]
    %v837 = vmul.f32 %v789, 1.442695
    %v838 = vpow.pop %v837
    %v839 = vmul.f32 %v790, 1.442695
    %v840 = vpow.pop %v839
    %v841 = vmul.f32 %v791, 1.442695
    %v842 = vpow.pop %v841
    %v843 = vmul.f32 %v792, 1.442695
    %v844 = vpow.pop %v843
    %v845 = vmul.f32 %v793, 1.442695
    %v846 = vpow.pop %v845
    %v847 = vmul.f32 %v794, 1.442695
    %v848 = vpow.pop %v847
    %v849 = vmul.f32 %v795, 1.442695
    %v850 = vpow.pop %v849
    %v851 = vmul.f32 %v796, 1.442695
    %v852 = vpow.pop %v851
    %v853 = vmul.f32 %v797, 1.442695
    %v854 = vpow.pop %v853
    %v855 = vmul.f32 %v798, 1.442695
    %v856 = vpow.pop %v855
    %v857 = vmul.f32 %v799, 1.442695
    %v858 = vpow.pop %v857
    %v859 = vmul.f32 %v800, 1.442695
    %v860 = vpow.pop %v859
    %v861 = vmul.f32 %v801, 1.442695
    %v862 = vpow.pop %v861
    %v863 = vmul.f32 %v802, 1.442695
    %v864 = vpow.pop %v863
    %v865 = vmul.f32 %v803, 1.442695
    %v866 = vpow.pop %v865
    %v867 = vmul.f32 %v804, 1.442695
    %v868 = vpow.pop %v867
    %v869 = vmul.f32 %v838, %v821
    %v870 = vmul.f32 %v840, %v822
    %v871 = vmul.f32 %v842, %v823
    %v872 = vmul.f32 %v844, %v824
    %v873 = vmul.f32 %v846, %v825
    %v874 = vmul.f32 %v848, %v826
    %v875 = vmul.f32 %v850, %v827
    %v876 = vmul.f32 %v852, %v828
    %v877 = vmul.f32 %v854, %v829
    %v878 = vmul.f32 %v856, %v830
    %v879 = vmul.f32 %v858, %v831
    %v880 = vmul.f32 %v860, %v832
    %v881 = vmul.f32 %v862, %v833
    %v882 = vmul.f32 %v864, %v834
    %v883 = vmul.f32 %v866, %v835
    %v884 = vmul.f32 %v868, %v836
    %v885 = vadd.f32 %v773, %v869
    %v886 = vadd.f32 %v774, %v870
    %v887 = vadd.f32 %v775, %v871
    %v888 = vadd.f32 %v776, %v872
    %v889 = vadd.f32 %v777, %v873
    %v890 = vadd.f32 %v778, %v874
    %v891 = vadd.f32 %v779, %v875
    %v892 = vadd.f32 %v780, %v876
    %v893 = vadd.f32 %v781, %v877
    %v894 = vadd.f32 %v782, %v878
    %v895 = vadd.f32 %v783, %v879
    %v896 = vadd.f32 %v784, %v880
    %v897 = vadd.f32 %v785, %v881
    %v898 = vadd.f32 %v786, %v882
    %v899 = vadd.f32 %v787, %v883
    %v900 = vadd.f32 %v788, %v884
    %v901 = vmul.f32 %v838, %v838
    %v902 = vmul.f32 %v840, %v840
    %v903 = vmul.f32 %v842, %v842
    %v904 = vmul.f32 %v844, %v844
    %v905 = vmul.f32 %v846, %v846
    %v906 = vmul.f32 %v848, %v848
    %v907 = vmul.f32 %v850, %v850
    %v908 = vmul.f32 %v852, %v852
    %v909 = vmul.f32 %v854, %v854
    %v910 = vmul.f32 %v856, %v856
    %v911 = vmul.f32 %v858, %v858
    %v912 = vmul.f32 %v860, %v860
    %v913 = vmul.f32 %v862, %v862
    %v914 = vmul.f32 %v864, %v864
    %v915 = vmul.f32 %v866, %v866
    %v916 = vmul.f32 %v868, %v868
    %v917 = vsub.f32 %v773, %v805
    %v918 = vsub.f32 %v774, %v806
    %v919 = vsub.f32 %v775, %v807
    %v920 = vsub.f32 %v776, %v808
    %v921 = vsub.f32 %v777, %v809
    %v922 = vsub.f32 %v778, %v810
    %v923 = vsub.f32 %v779, %v811
    %v924 = vsub.f32 %v780, %v812
    %v925 = vsub.f32 %v781, %v813
    %v926 = vsub.f32 %v782, %v814
    %v927 = vsub.f32 %v783, %v815
    %v928 = vsub.f32 %v784, %v816
    %v929 = vsub.f32 %v785, %v817
    %v930 = vsub.f32 %v786, %v818
    %v931 = vsub.f32 %v787, %v819
    %v932 = vsub.f32 %v788, %v820
    %v933 = vmul.f32 %v917, %v917
    %v934 = vmul.f32 %v918, %v918
    %v935 = vmul.f32 %v919, %v919
    %v936 = vmul.f32 %v920, %v920
    %v937 = vmul.f32 %v921, %v921
    %v938 = vmul.f32 %v922, %v922
    %v939 = vmul.f32 %v923, %v923
    %v940 = vmul.f32 %v924, %v924
    %v941 = vmul.f32 %v925, %v925
    %v942 = vmul.f32 %v926, %v926
    %v943 = vmul.f32 %v927, %v927
    %v944 = vmul.f32 %v928, %v928
    %v945 = vmul.f32 %v929, %v929
    %v946 = vmul.f32 %v930, %v930
    %v947 = vmul.f32 %v931, %v931
    %v948 = vmul.f32 %v932, %v932
    %v949 = vadd.f32 %v901, %v933
    %v950 = vadd.f32 %v902, %v934
    %v951 = vadd.f32 %v903, %v935
    %v952 = vadd.f32 %v904, %v936
    %v953 = vadd.f32 %v905, %v937
    %v954 = vadd.f32 %v906, %v938
    %v955 = vadd.f32 %v907, %v939
    %v956 = vadd.f32 %v908, %v940
    %v957 = vadd.f32 %v909, %v941
    %v958 = vadd.f32 %v910, %v942
    %v959 = vadd.f32 %v911, %v943
    %v960 = vadd.f32 %v912, %v944
    %v961 = vadd.f32 %v913, %v945
    %v962 = vadd.f32 %v914, %v946
    %v963 = vadd.f32 %v915, %v947
    %v964 = vadd.f32 %v916, %v948
    %v965 = vadd.f32 %v949, %v950
    %v966 = vadd.f32 %v965, %v951
    %v967 = vadd.f32 %v966, %v952
    %v968 = vadd.f32 %v967, %v953
    %v969 = vadd.f32 %v968, %v954
    %v970 = vadd.f32 %v969, %v955
    %v971 = vadd.f32 %v970, %v956
    %v972 = vadd.f32 %v971, %v957
    %v973 = vadd.f32 %v972, %v958
    %v974 = vadd.f32 %v973, %v959
    %v975 = vadd.f32 %v974, %v960
    %v976 = vadd.f32 %v975, %v961
    %v977 = vadd.f32 %v976, %v962
    %v978 = vadd.f32 %v977, %v963
    %v979 = vadd.f32 %v978, %v964
    %v980 = vrot.slane %v979, 4
    %v981 = vadd.f32 %v979, %v980
    %v982 = vrot.slane %v981, 2
    %v983 = vadd.f32 %v981, %v982
    %v984 = vrot.slane %v983, 1
    %v985 = vadd.f32 %v983, %v984
    %v986 = vadd.f32 %v789, %v790
    %v987 = vadd.f32 %v986, %v791
    %v988 = vadd.f32 %v987, %v792
    %v989 = vadd.f32 %v988, %v793
    %v990 = vadd.f32 %v989, %v794
    %v991 = vadd.f32 %v990, %v795
    %v992 = vadd.f32 %v991, %v796
    %v993 = vadd.f32 %v992, %v797
    %v994 = vadd.f32 %v993, %v798
    %v995 = vadd.f32 %v994, %v799
    %v996 = vadd.f32 %v995, %v800
    %v997 = vadd.f32 %v996, %v801
    %v998 = vadd.f32 %v997, %v802
    %v999 = vadd.f32 %v998, %v803
    %v1000 = vadd.f32 %v999, %v804
    %v1001 = vrot.slane %v1000, 4
    %v1002 = vadd.f32 %v1000, %v1001
    %v1003 = vrot.slane %v1002, 2
    %v1004 = vadd.f32 %v1002, %v1003
    %v1005 = vrot.slane %v1004, 1
    %v1006 = vadd.f32 %v1004, %v1005
    %v1007 = vadd.f32 %v721, %v985
    %v1008 = vadd.f32 %v722, %v1006
    %v1009 = vld [vmem:[%s14] sm:$0x1]
    %v1010 = vld [vmem:[%s15] sm:$0x1]
    %v1011 = vld [vmem:[%s16] sm:$0x1]
    %v1012 = vld [vmem:[%s17] sm:$0x1]
    %v1013 = vmul.f32 %v1010, 1.442695
    %v1014 = vpow.pop %v1013
    %v1015 = vmul.f32 %v1014, %v1012
    %v1016 = vadd.f32 %v1009, %v1015
    %v1017 = vmul.f32 %v1014, %v1014
    %v1018 = vsub.f32 %v1009, %v1011
    %v1019 = vmul.f32 %v1018, %v1018
    %v1020 = vadd.f32 %v1017, %v1019
    %v1021 = vadd.f32 %v1020, 0.0
    %v1022 = vadd.f32 %v1010, 0.0
    %v1023 = vadd.f32 %v1007, %v1021
    %v1024 = vadd.f32 %v1008, %v1022
    %v1026 = vperm.slane %v1016, 0
    %1028 = vmatpush.xpose.msra.mxu0 %v900
    %1029 = vmatpush.xpose.msra.mxu0 %v899
    %1030 = vmatpush.xpose.msra.mxu0 %v898
    %1031 = vmatpush.xpose.msra.mxu0 %v897
    %1032 = vmatpush.xpose.msra.mxu0 %v896
    %1033 = vmatpush.xpose.msra.mxu0 %v895
    %1034 = vmatpush.xpose.msra.mxu0 %v894
    %1035 = vmatpush.xpose.msra.mxu0 %v893
    %1036 = vmatpush.xpose.msra.mxu0 %v892
    %1037 = vmatpush.xpose.msra.mxu0 %v891
    %1038 = vmatpush.xpose.msra.mxu0 %v890
    %1039 = vmatpush.xpose.msra.mxu0 %v889
    %1040 = vmatpush.xpose.msra.mxu0 %v888
    %1041 = vmatpush.xpose.msra.mxu0 %v887
    %1042 = vmatpush.xpose.msra.mxu0 %v886
    %1043 = vmatpush.xpose.msra.mxu0 %v885
    %1044 = vmatmul.f32.gmra.mxu0 %v772
    %v1045 = vpop.f32.mrf.mxu0
    %v1046 = vadd.f32 %v1026, %v1045
    %1047 = vdwg.mxu0
    %v1048 = vmax.f32 %v1046, 0.0
    %v1049 = vld [vmem:[%s18] sm:$0x1]
    %v1050 = vld [vmem:[%s19] sm:$0x1]
    %v1051 = vld [vmem:[%s20] sm:$0x1]
    %v1052 = vld [vmem:[%s21] sm:$0x1]
    %v1053 = vmul.f32 %v1050, 1.442695
    %v1054 = vpow.pop %v1053
    %v1055 = vmul.f32 %v1054, %v1052
    %v1056 = vadd.f32 %v1049, %v1055
    %v1057 = vmul.f32 %v1054, %v1054
    %v1058 = vsub.f32 %v1049, %v1051
    %v1059 = vmul.f32 %v1058, %v1058
    %v1060 = vadd.f32 %v1057, %v1059
    %v1061 = vadd.f32 %v1060, 0.0
    %v1062 = vadd.f32 %v1050, 0.0
    %v1063 = vadd.f32 %v1023, %v1061
    %v1064 = vadd.f32 %v1024, %v1062
    %v1065 = vstv %s225
    %v1066 = vmul.f32 %v1065, 1.442695
    %v1067 = vpow.pop %v1066
    %s1068 = vtos %v1067
    %s1069 = smul.f32 %s1068, %s227
    %s1070 = sadd.f32 %s224, %s1069
    %v1072 = vperm.slane %v1056, 0
    %v1074 = vmul.f32 %v1048, %v1072
    %vm1075 = vcmask 1043456
    %v1076 = vsel %vm1075, %v1074, 0.0
    %1077 = vadd.xlane.f32.xlu0 %v1076
    %v1078 = vpop.xlane.xlu0 %1077
    %v1079 = vstv %s1070
    %v1080 = vadd.f32 %v1078, %v1079
    %s1081 = smul.f32 %s1068, %s1068
    %s1082 = ssub.f32 %s224, %s226
    %s1083 = smul.f32 %s1082, %s1082
    %s1084 = sadd.f32 %s1081, %s1083
    %vm1085 = vcmask 1040384
    %v1086 = vsel %vm1085, %v703, 0.0
    %v1087 = vsel %vm1085, %v704, 0.0
    %v1088 = vadd.f32 %v1086, %v1087
    %1089 = vadd.xlane.f32.xlu0 %v1088
    %v1090 = vpop.xlane.xlu0 %1089
    %v1091 = vrot.slane %v1090, 4
    %v1092 = vadd.f32 %v1090, %v1091
    %v1093 = vrot.slane %v1092, 2
    %v1094 = vadd.f32 %v1092, %v1093
    %v1095 = vrot.slane %v1094, 1
    %v1096 = vadd.f32 %v1094, %v1095
    %s1097 = vtos %v1096
    %s1098 = sadd.f32 %s1084, %s1097
    %v1099 = vsel %vm1085, %v1063, 0.0
    %1100 = vadd.xlane.f32.xlu0 %v1099
    %v1101 = vpop.xlane.xlu0 %1100
    %v1102 = vrot.slane %v1101, 4
    %v1103 = vadd.f32 %v1101, %v1102
    %v1104 = vrot.slane %v1103, 2
    %v1105 = vadd.f32 %v1103, %v1104
    %v1106 = vrot.slane %v1105, 1
    %v1107 = vadd.f32 %v1105, %v1106
    %s1108 = vtos %v1107
    %s1109 = sadd.f32 %s1098, %s1108
    %v1110 = vsel %vm1085, %v705, 0.0
    %v1111 = vsel %vm1085, %v706, 0.0
    %v1112 = vadd.f32 %v1110, %v1111
    %1113 = vadd.xlane.f32.xlu0 %v1112
    %v1114 = vpop.xlane.xlu0 %1113
    %v1115 = vrot.slane %v1114, 4
    %v1116 = vadd.f32 %v1114, %v1115
    %v1117 = vrot.slane %v1116, 2
    %v1118 = vadd.f32 %v1116, %v1117
    %v1119 = vrot.slane %v1118, 1
    %v1120 = vadd.f32 %v1118, %v1119
    %s1121 = vtos %v1120
    %s1122 = sadd.f32 %s225, %s1121
    %v1123 = vsel %vm1085, %v1064, 0.0
    %1124 = vadd.xlane.f32.xlu0 %v1123
    %v1125 = vpop.xlane.xlu0 %1124
    %v1126 = vrot.slane %v1125, 4
    %v1127 = vadd.f32 %v1125, %v1126
    %v1128 = vrot.slane %v1127, 2
    %v1129 = vadd.f32 %v1127, %v1128
    %v1130 = vrot.slane %v1129, 1
    %v1131 = vadd.f32 %v1129, %v1130
    %s1132 = vtos %v1131
    %s1133 = sadd.f32 %s1122, %s1132
    %s1134 = smul.f32 %s233, %s1109
    %s1135 = ssub.f32 %s1134, %s1133
    %s1136 = ssub.f32 %s223, 0.5
    %s1137 = smul.f32 %s1136, 49537.0
    %s1138 = sadd.f32 %s1135, %s1137
    %v1139 = vstv %s1138
    %v1142 = vrot.slane %v1139, 4
    %v1143 = vsel %vm1075, %v1080, %v1142
    %1145 = vst [vmem:[#allocation19] sm:$0xff] %v1143
    // Predicated region
    $region130: #{tpu_custom_call.1} parent=1 // pred_check
      _
    $region131: #{tpu_custom_call.1} parent=1 // pred_check_branch
      %1147 = sbr.rel (0) target = $region133
    $region132: #{tpu_custom_call.1} parent=1 // pred_region
      %1149 = vsyncadd [#allocation4], 0
      %s1151 = sshll.u32 [#allocation19], 4
      %s1152 = int_to_ptr.vmem [resolvable:$true] %s1151
      %s1153 = sshll.u32 %s22, 4
      %s1154 = int_to_ptr.hbm [resolvable:$true] %s1153
      %1156 = dma.vmem_to_hbm [thread:$0]  %s1152, 128, %s1154, [#allocation4]
    $region133: #{tpu_custom_call.1} parent=1 // pred_fallthru
      _
    // Predicated region
    $region134: #{tpu_custom_call.1} parent=1 // pred_check
      _
    $region135: #{tpu_custom_call.1} parent=1 // pred_check_branch
      %1158 = sbr.rel (0) target = $region137
    $region136: #{tpu_custom_call.1} parent=1 // pred_region
      %1160 = dma.done [#allocation4], 128
    $region137: #{tpu_custom_call.1} parent=1 // pred_fallthru
      _
    %1161 = vsyncpa [#allocation3], 1
    %1162 = vsyncpa [#allocation8], 1
    %1163 = vsyncpa [#allocation11], 1
    %1164 = vsyncpa [#allocation14], 1
    %1165 = vsyncpa [#allocation17], 1
    %1166 = vsyncpa [#allocation4], 1
    %1167 = vsyncpa [#allocation5], 1

</llo_original>
